<compile_context>
chip_gen: v5e
topology: v5e:2x2
jax: 0.10.0
libtpu: 0.0.40
codegen_flags: <defaults>
</compile_context>

<pallas_src>
import functools
import numpy as np
import jax
import jax.numpy as jnp
from jax.experimental import pallas as pl
from jax.experimental.pallas import tpu as pltpu


# ----------------------------------------------------------------------------
# Host-side resize matrices (numpy, computed once in init_params)
# ----------------------------------------------------------------------------
def bilinear_matrix(out_size, in_size):
    """Row matrix reproducing F.interpolate(mode='bilinear',
    align_corners=False) along one axis."""
    M = np.zeros((out_size, in_size), dtype=np.float32)
    if in_size == 1:
        M[:, 0] = 1.0
        return M
    scale = in_size / out_size
    for i in range(out_size):
        src = (i + 0.5) * scale - 0.5
        src = min(max(src, 0.0), in_size - 1)      # clamp before frac (PyTorch)
        i0 = int(np.floor(src))
        i1 = min(i0 + 1, in_size - 1)
        frac = src - i0
        M[i, i0] += 1.0 - frac
        M[i, i1] += frac
    return M


def avgpool2_matrix(in_size):
    """Matrix for F.avg_pool2d(kernel=2, stride=2) along one axis."""
    out = in_size // 2
    M = np.zeros((out, in_size), dtype=np.float32)
    for i in range(out):
        M[i, 2 * i] = 0.5
        M[i, 2 * i + 1] = 0.5
    return M


def _kron_T(A):
    """Shared separable-resize matrix: per sample out_flat = x_flat @ kron(A,A)^T."""
    return jnp.asarray(np.kron(A, A).T.astype(np.float32))


def _build_consts(spatial):
    s, s2, s4, s8 = spatial, spatial // 2, spatial // 4, spatial // 8
    return {
        "k16": _kron_T(avgpool2_matrix(s)),        # (256, 64)  16 -> 8
        "k8":  _kron_T(avgpool2_matrix(s2)),       # (64, 16)    8 -> 4
        "k4":  _kron_T(avgpool2_matrix(s4)),       # (16, 4)     4 -> 2
        "u24": _kron_T(bilinear_matrix(s2, s4)),   # (16, 64)    4 -> 8
        "u14": _kron_T(bilinear_matrix(s2, s8)),   # (4, 64)     2 -> 8
        "upf": _kron_T(bilinear_matrix(s, s2)),    # (64, 256)   8 -> 16
    }


# ----------------------------------------------------------------------------
# The single fused Pallas kernel (one sample per grid step)
# ----------------------------------------------------------------------------
def _fused_kernel(x_ref,
                  w1_ref, b1_ref, w2_ref, b2_ref, w3_ref, b3_ref, w4_ref, b4_ref,
                  wc1a_ref, wc1b_ref, wc1cd_ref, bc1_ref, wc2_ref, bc2_ref,
                  k16_ref, k8_ref, k4_ref, u24_ref, u14_ref, upf_ref,
                  out_ref, feat_ref):
    dot = functools.partial(jnp.dot, preferred_element_type=jnp.float32)

    x = x_ref[...]                                              # (Cin, 256)

    # ---- backbone: shared-kron avg-pool + 1x1 conv (+ReLU), all on-chip ----
    x1 = jnp.maximum(dot(w1_ref[...], dot(x,  k16_ref[...])) + b1_ref[...], 0.0)  # (8, 64)
    x2 = jnp.maximum(dot(w2_ref[...], dot(x1, k8_ref[...]))  + b2_ref[...], 0.0)  # (16, 16)
    x3 = jnp.maximum(dot(w3_ref[...], dot(x2, k4_ref[...]))  + b3_ref[...], 0.0)  # (32, 4)
    x4 = jnp.maximum(dot(w4_ref[...], x3)                    + b4_ref[...], 0.0)  # (32, 4)

    # ---- similarity feature: GAP(x4) + L2 normalize over channels ----------
    v = jnp.mean(x4, axis=1, keepdims=True)                     # (32, 1)
    ss = jnp.sum(v * v, axis=0, keepdims=True)                  # (1, 1)
    feat_ref[...] = (v * jax.lax.rsqrt(jnp.maximum(ss, 1e-24))).astype(feat_ref.dtype)

    # ---- classifier: bilinear up to 8x8, grouped "concat" matmuls ----------
    u2 = dot(x2, u24_ref[...])                                  # (16, 64)
    u34 = dot(jnp.concatenate([x3, x4], axis=0), u14_ref[...])  # (64, 64) fused x3/x4 up
    h = (dot(wc1a_ref[...], x1) + dot(wc1b_ref[...], u2)
         + dot(wc1cd_ref[...], u34) + bc1_ref[...])
    h = jnp.maximum(h, 0.0)                                     # (32, 64)
    logits = dot(wc2_ref[...], h) + bc2_ref[...]                # (nc, 64)

    # ---- final bilinear upsample back to the input resolution --------------
    out_ref[...] = dot(logits, upf_ref[...]).astype(out_ref.dtype)   # (nc, 256)


def _fused_pallas(xb_flat, wts, consts, num_classes):
    B, C, HW = xb_flat.shape
    c4 = wts["w4"].shape[0]

    args = (xb_flat,
            wts["w1"], wts["b1"], wts["w2"], wts["b2"],
            wts["w3"], wts["b3"], wts["w4"], wts["b4"],
            wts["wc1a"], wts["wc1b"], wts["wc1cd"], wts["bc1"],
            wts["wc2"], wts["bc2"],
            consts["k16"], consts["k8"], consts["k4"],
            consts["u24"], consts["u14"], consts["upf"])

    # weights / resize constants: full-array blocks, batch-independent
    # index_map -> DMA'd once, stay resident across the parallel batch grid.
    def const_spec(a):
        return pl.BlockSpec(a.shape, lambda b: (0, 0))

    in_specs = [pl.BlockSpec((None, C, HW), lambda b: (b, 0, 0))]
    in_specs += [const_spec(a) for a in args[1:]]

    out_shapes = (jax.ShapeDtypeStruct((B, num_classes, HW), jnp.float32),
                  jax.ShapeDtypeStruct((B, c4, 1), jnp.float32))
    out_specs = (pl.BlockSpec((None, num_classes, HW), lambda b: (b, 0, 0)),
                 pl.BlockSpec((None, c4, 1), lambda b: (b, 0, 0)))

    return pl.pallas_call(
        _fused_kernel,
        out_shape=out_shapes,
        grid=(B,),
        in_specs=in_specs,
        out_specs=out_specs,
        compiler_params=pltpu.CompilerParams(
            dimension_semantics=("parallel",)),   # v7x: shard batch over 2 TCs
    )(*args)


@functools.partial(jax.jit, static_argnames=("num_classes",))
def _fused_forward(xb, weights, consts, num_classes):
    """xb: (B, C, H, W) -> (B, num_classes, H, W) logits, (B, C4, 1, 1) feat."""
    B, C, H, W = xb.shape
    xf = xb.reshape(B, C, H * W)                 # layout-preserving (no copy)
    out_flat, feat_flat = _fused_pallas(xf, weights, consts, num_classes)
    out = out_flat.reshape(B, num_classes, H, W)
    feat = feat_flat.reshape(B, -1, 1, 1)
    return out, feat


# ----------------------------------------------------------------------------
# Synthetic backbone / classifier parameters (deterministic init)
# ----------------------------------------------------------------------------
def init_params(key, in_ch=4, num_classes=3, spatial=16):
    ks = jax.random.split(key, 12)

    def w(k, co, ci):
        return (0.1 * jax.random.normal(k, (co, ci))).astype(jnp.float32)

    def b(k, co):
        return (0.01 * jax.random.normal(k, (co,))).astype(jnp.float32)

    c1, c2, c3, c4, hid = 8, 16, 32, 32, 32
    w1, b1 = w(ks[0], c1, in_ch), b(ks[1], c1)
    w2, b2 = w(ks[2], c2, c1),    b(ks[3], c2)
    w3, b3 = w(ks[4], c3, c2),    b(ks[5], c3)
    w4, b4 = w(ks[6], c4, c3),    b(ks[7], c4)
    wc1, bc1 = w(ks[8], hid, c1 + c2 + c3 + c4), b(ks[9], hid)
    wc2, bc2 = w(ks[10], num_classes, hid),      b(ks[11], num_classes)

    weights = {
        "w1": w1, "b1": b1.reshape(c1, 1),
        "w2": w2, "b2": b2.reshape(c2, 1),
        "w3": w3, "b3": b3.reshape(c3, 1),
        "w4": w4, "b4": b4.reshape(c4, 1),
        "wc1a": wc1[:, :c1],
        "wc1b": wc1[:, c1:c1 + c2],
        "wc1cd": wc1[:, c1 + c2:],               # x3|x4 groups pre-merged
        "bc1": bc1.reshape(hid, 1),
        "wc2": wc2, "bc2": bc2.reshape(num_classes, 1),
    }
    raw = {"w1": w1, "b1": b1, "w2": w2, "b2": b2, "w3": w3, "b3": b3,
           "w4": w4, "b4": b4, "wc1": wc1, "bc1": bc1, "wc2": wc2, "bc2": bc2}
    consts = _build_consts(spatial)              # batch-independent constants
    return {"weights": weights, "raw": raw, "consts": consts,
            "num_classes": num_classes, "spatial": spatial}


# ----------------------------------------------------------------------------
# Forward (mirrors _SegmentationSimiralityModel.forward)
# ----------------------------------------------------------------------------
def segmentation_similarity_forward(x, params, y=None):
    N = x.shape[0]
    xb = x if y is None else jnp.concatenate([x, y], axis=0)
    out, feat = _fused_forward(xb, params["weights"], params["consts"],
                               num_classes=params["num_classes"])
    if y is None:
        return out
    # (output_x, output_y, feat_z1 = norm(GAP(y4)), feat_z0 = norm(GAP(x4)))
    return out[:N], out[N:], [feat[N:]], [feat[:N]]


# ----------------------------------------------------------------------------
# Plain-XLA reference of the same synthetic model (correctness check only)
# ----------------------------------------------------------------------------
def _reference_forward(x, params, y=None):
    r = params["raw"]
    s = params["spatial"]
    P = jax.lax.Precision.HIGHEST
    A_p16 = jnp.asarray(avgpool2_matrix(s))
    A_p8 = jnp.asarray(avgpool2_matrix(s // 2))
    A_p4 = jnp.asarray(avgpool2_matrix(s // 4))
    A_u84 = jnp.asarray(bilinear_matrix(s // 2, s // 4))
    A_u82 = jnp.asarray(bilinear_matrix(s // 2, s // 8))
    A_u168 = jnp.asarray(bilinear_matrix(s, s // 2))

    def conv(xx, w, bb, relu=True):
        o = jnp.einsum('oc,nchw->nohw', w, xx, precision=P) + bb[None, :, None, None]
        return jnp.maximum(o, 0.0) if relu else o

    def resize(xx, A):
        return jnp.einsum('hp,ncpq,wq->nchw', A, xx, A, precision=P)

    def backbone(xx):
        x1 = conv(resize(xx, A_p16), r["w1"], r["b1"])
        x2 = conv(resize(x1, A_p8), r["w2"], r["b2"])
        x3 = conv(resize(x2, A_p4), r["w3"], r["b3"])
        x4 = conv(x3, r["w4"], r["b4"])
        return x1, x2, x3, x4

    def classifier(x1, x2, x3, x4):
        cat = jnp.concatenate([x1, resize(x2, A_u84),
                               resize(x3, A_u82), resize(x4, A_u82)], axis=1)
        h = conv(cat, r["wc1"], r["bc1"])
        return conv(h, r["wc2"], r["bc2"], relu=False)

    def gapnorm(f):
        v = jnp.mean(f, axis=(2, 3), keepdims=True)
        n = jnp.sqrt(jnp.sum(v * v, axis=1, keepdims=True))
        return v / jnp.maximum(n, 1e-12)

    x1, x2, x3, x4 = backbone(x)
    out_x = resize(classifier(x1, x2, x3, x4), A_u168)
    if y is None:
        return out_x
    y1, y2, y3, y4 = backbone(y)
    out_y = resize(classifier(y1, y2, y3, y4), A_u168)
    return out_x, out_y, [gapnorm(y4)], [gapnorm(x4)]


# ----------------------------------------------------------------------------
if __name__ == "__main__":
    key = jax.random.PRNGKey(0)
    kx, ky, kp = jax.random.split(key, 3)

    N, C, H, W = 2, 4, 16, 16
    x = jax.random.normal(kx, (N, C, H, W), dtype=jnp.float32)
    y = jax.random.normal(ky, (N, C, H, W), dtype=jnp.float32)
    params = init_params(kp, in_ch=C, num_classes=3, spatial=H)

    # inference branch (y is None) — one fused pallas_call, grid over batch
    out_infer = jax.block_until_ready(segmentation_similarity_forward(x, params, None))
    assert out_infer.shape == (N, 3, H, W)

    # training / similarity branch (y provided) — x & y stacked, one fused call
    out_x, out_y, feat_z1, feat_z0 = segmentation_similarity_forward(x, params, y)
    out_x = jax.block_until_ready(out_x)
    out_y = jax.block_until_ready(out_y)
    fz1 = jax.block_until_ready(feat_z1[0])
    fz0 = jax.block_until_ready(feat_z0[0])
    assert out_x.shape == (N, 3, H, W) and out_y.shape == (N, 3, H, W)
    assert fz1.shape == (N, 32, 1, 1) and fz0.shape == (N, 32, 1, 1)
    assert bool(jnp.allclose(jnp.sum(fz0[:, :, 0, 0] ** 2, axis=1), 1.0, atol=1e-3))
    assert bool(jnp.allclose(jnp.sum(fz1[:, :, 0, 0] ** 2, axis=1), 1.0, atol=1e-3))

    # cross-check fused kernel vs. a plain-XLA reference of the same model
    ref_infer = _reference_forward(x, params, None)
    ref_x, ref_y, ref_z1, ref_z0 = _reference_forward(x, params, y)
    tol = dict(atol=1e-3, rtol=1e-3)
    ok = (bool(jnp.allclose(out_infer, ref_infer, **tol))
          and bool(jnp.allclose(out_x, ref_x, **tol))
          and bool(jnp.allclose(out_y, ref_y, **tol))
          and bool(jnp.allclose(fz1, ref_z1[0], **tol))
          and bool(jnp.allclose(fz0, ref_z0[0], **tol)))
    assert ok, "fused Pallas forward deviates from the XLA reference"

    print("KERNEL_OK")
</pallas_src>

<mosaic_0001>
module attributes {stable_mosaic.version = 11 : i64} {
  func.func @_fused_kernel(%arg0: i32, %arg1: memref<1x4x256xf32, #tpu.memory_space<vmem>>, %arg2: memref<8x4xf32, #tpu.memory_space<vmem>>, %arg3: memref<8x1xf32, #tpu.memory_space<vmem>>, %arg4: memref<16x8xf32, #tpu.memory_space<vmem>>, %arg5: memref<16x1xf32, #tpu.memory_space<vmem>>, %arg6: memref<32x16xf32, #tpu.memory_space<vmem>>, %arg7: memref<32x1xf32, #tpu.memory_space<vmem>>, %arg8: memref<32x32xf32, #tpu.memory_space<vmem>>, %arg9: memref<32x1xf32, #tpu.memory_space<vmem>>, %arg10: memref<32x8xf32, #tpu.memory_space<vmem>>, %arg11: memref<32x16xf32, #tpu.memory_space<vmem>>, %arg12: memref<32x64xf32, #tpu.memory_space<vmem>>, %arg13: memref<32x1xf32, #tpu.memory_space<vmem>>, %arg14: memref<3x32xf32, #tpu.memory_space<vmem>>, %arg15: memref<3x1xf32, #tpu.memory_space<vmem>>, %arg16: memref<256x64xf32, #tpu.memory_space<vmem>>, %arg17: memref<64x16xf32, #tpu.memory_space<vmem>>, %arg18: memref<16x4xf32, #tpu.memory_space<vmem>>, %arg19: memref<16x64xf32, #tpu.memory_space<vmem>>, %arg20: memref<4x64xf32, #tpu.memory_space<vmem>>, %arg21: memref<64x256xf32, #tpu.memory_space<vmem>>, %arg22: memref<1x3x256xf32, #tpu.memory_space<vmem>>, %arg23: memref<1x32x1xf32, #tpu.memory_space<vmem>>) attributes {dimension_semantics = [#tpu.dimension_semantics<parallel>], iteration_bounds = array<i64: 2>, scalar_prefetch = 0 : i64, scratch_operands = 0 : i64, tpu.core_type = #tpu.core_type<tc>, window_params = [{transform_indices = @transform_0, window_bounds = array<i64: 1, 4, 256>}, {pipeline_mode = #tpu.pipeline_mode<synchronous>, transform_indices = @transform_1, window_bounds = array<i64: 8, 4>}, {pipeline_mode = #tpu.pipeline_mode<synchronous>, transform_indices = @transform_2, window_bounds = array<i64: 8, 1>}, {pipeline_mode = #tpu.pipeline_mode<synchronous>, transform_indices = @transform_3, window_bounds = array<i64: 16, 8>}, {pipeline_mode = #tpu.pipeline_mode<synchronous>, transform_indices = @transform_4, window_bounds = array<i64: 16, 1>}, {pipeline_mode = #tpu.pipeline_mode<synchronous>, transform_indices = @transform_5, window_bounds = array<i64: 32, 16>}, {pipeline_mode = #tpu.pipeline_mode<synchronous>, transform_indices = @transform_6, window_bounds = array<i64: 32, 1>}, {pipeline_mode = #tpu.pipeline_mode<synchronous>, transform_indices = @transform_7, window_bounds = array<i64: 32, 32>}, {pipeline_mode = #tpu.pipeline_mode<synchronous>, transform_indices = @transform_8, window_bounds = array<i64: 32, 1>}, {pipeline_mode = #tpu.pipeline_mode<synchronous>, transform_indices = @transform_9, window_bounds = array<i64: 32, 8>}, {pipeline_mode = #tpu.pipeline_mode<synchronous>, transform_indices = @transform_10, window_bounds = array<i64: 32, 16>}, {pipeline_mode = #tpu.pipeline_mode<synchronous>, transform_indices = @transform_11, window_bounds = array<i64: 32, 64>}, {pipeline_mode = #tpu.pipeline_mode<synchronous>, transform_indices = @transform_12, window_bounds = array<i64: 32, 1>}, {pipeline_mode = #tpu.pipeline_mode<synchronous>, transform_indices = @transform_13, window_bounds = array<i64: 3, 32>}, {pipeline_mode = #tpu.pipeline_mode<synchronous>, transform_indices = @transform_14, window_bounds = array<i64: 3, 1>}, {pipeline_mode = #tpu.pipeline_mode<synchronous>, transform_indices = @transform_15, window_bounds = array<i64: 256, 64>}, {pipeline_mode = #tpu.pipeline_mode<synchronous>, transform_indices = @transform_16, window_bounds = array<i64: 64, 16>}, {pipeline_mode = #tpu.pipeline_mode<synchronous>, transform_indices = @transform_17, window_bounds = array<i64: 16, 4>}, {pipeline_mode = #tpu.pipeline_mode<synchronous>, transform_indices = @transform_18, window_bounds = array<i64: 16, 64>}, {pipeline_mode = #tpu.pipeline_mode<synchronous>, transform_indices = @transform_19, window_bounds = array<i64: 4, 64>}, {pipeline_mode = #tpu.pipeline_mode<synchronous>, transform_indices = @transform_20, window_bounds = array<i64: 64, 256>}, {transform_indices = @transform_21, window_bounds = array<i64: 1, 3, 256>}, {transform_indices = @transform_22, window_bounds = array<i64: 1, 32, 1>}]} {
    %c0 = arith.constant 0 : index
    %c0_0 = arith.constant 0 : index
    %c0_1 = arith.constant 0 : index
    %0 = vector.load %arg1[%c0, %c0_0, %c0_1] : memref<1x4x256xf32, #tpu.memory_space<vmem>>, vector<1x4x256xf32>
    %1 = vector.shape_cast %0 : vector<1x4x256xf32> to vector<4x256xf32>
    %c0_2 = arith.constant 0 : index
    %c0_3 = arith.constant 0 : index
    %2 = vector.load %arg2[%c0_2, %c0_3] : memref<8x4xf32, #tpu.memory_space<vmem>>, vector<8x4xf32>
    %c0_4 = arith.constant 0 : index
    %c0_5 = arith.constant 0 : index
    %3 = vector.load %arg16[%c0_4, %c0_5] : memref<256x64xf32, #tpu.memory_space<vmem>>, vector<256x64xf32>
    %cst = arith.constant dense<0.000000e+00> : vector<4x64xf32>
    %4 = tpu.matmul %1, %3, %cst {dimension_numbers = #tpu.dot_dimension_numbers<[1], [0], [0], [1], [0, 0, 1, 1], [], []>} : vector<4x256xf32>, vector<256x64xf32>, vector<4x64xf32> -> vector<4x64xf32>
    %cst_6 = arith.constant dense<0.000000e+00> : vector<8x64xf32>
    %5 = tpu.matmul %2, %4, %cst_6 {dimension_numbers = #tpu.dot_dimension_numbers<[1], [0], [0], [1], [0, 0, 1, 1], [], []>} : vector<8x4xf32>, vector<4x64xf32>, vector<8x64xf32> -> vector<8x64xf32>
    %c0_7 = arith.constant 0 : index
    %c0_8 = arith.constant 0 : index
    %6 = vector.load %arg3[%c0_7, %c0_8] : memref<8x1xf32, #tpu.memory_space<vmem>>, vector<8x1xf32>
    %7 = vector.broadcast %6 : vector<8x1xf32> to vector<8x64xf32>
    %8 = arith.addf %5, %7 : vector<8x64xf32>
    %cst_9 = arith.constant 0.000000e+00 : f32
    %9 = vector.broadcast %cst_9 : f32 to vector<8x64xf32>
    %10 = arith.maximumf %8, %9 : vector<8x64xf32>
    %c0_10 = arith.constant 0 : index
    %c0_11 = arith.constant 0 : index
    %11 = vector.load %arg4[%c0_10, %c0_11] : memref<16x8xf32, #tpu.memory_space<vmem>>, vector<16x8xf32>
    %c0_12 = arith.constant 0 : index
    %c0_13 = arith.constant 0 : index
    %12 = vector.load %arg17[%c0_12, %c0_13] : memref<64x16xf32, #tpu.memory_space<vmem>>, vector<64x16xf32>
    %cst_14 = arith.constant dense<0.000000e+00> : vector<8x16xf32>
    %13 = tpu.matmul %10, %12, %cst_14 {dimension_numbers = #tpu.dot_dimension_numbers<[1], [0], [0], [1], [0, 0, 1, 1], [], []>} : vector<8x64xf32>, vector<64x16xf32>, vector<8x16xf32> -> vector<8x16xf32>
    %cst_15 = arith.constant dense<0.000000e+00> : vector<16x16xf32>
    %14 = tpu.matmul %11, %13, %cst_15 {dimension_numbers = #tpu.dot_dimension_numbers<[1], [0], [0], [1], [0, 0, 1, 1], [], []>} : vector<16x8xf32>, vector<8x16xf32>, vector<16x16xf32> -> vector<16x16xf32>
    %c0_16 = arith.constant 0 : index
    %c0_17 = arith.constant 0 : index
    %15 = vector.load %arg5[%c0_16, %c0_17] : memref<16x1xf32, #tpu.memory_space<vmem>>, vector<16x1xf32>
    %16 = vector.broadcast %15 : vector<16x1xf32> to vector<16x16xf32>
    %17 = arith.addf %14, %16 : vector<16x16xf32>
    %cst_18 = arith.constant 0.000000e+00 : f32
    %18 = vector.broadcast %cst_18 : f32 to vector<16x16xf32>
    %19 = arith.maximumf %17, %18 : vector<16x16xf32>
    %c0_19 = arith.constant 0 : index
    %c0_20 = arith.constant 0 : index
    %20 = vector.load %arg6[%c0_19, %c0_20] : memref<32x16xf32, #tpu.memory_space<vmem>>, vector<32x16xf32>
    %c0_21 = arith.constant 0 : index
    %c0_22 = arith.constant 0 : index
    %21 = vector.load %arg18[%c0_21, %c0_22] : memref<16x4xf32, #tpu.memory_space<vmem>>, vector<16x4xf32>
    %cst_23 = arith.constant dense<0.000000e+00> : vector<16x4xf32>
    %22 = tpu.matmul %19, %21, %cst_23 {dimension_numbers = #tpu.dot_dimension_numbers<[1], [0], [0], [1], [0, 0, 1, 1], [], []>} : vector<16x16xf32>, vector<16x4xf32>, vector<16x4xf32> -> vector<16x4xf32>
    %cst_24 = arith.constant dense<0.000000e+00> : vector<32x4xf32>
    %23 = tpu.matmul %20, %22, %cst_24 {dimension_numbers = #tpu.dot_dimension_numbers<[1], [0], [0], [1], [0, 0, 1, 1], [], []>} : vector<32x16xf32>, vector<16x4xf32>, vector<32x4xf32> -> vector<32x4xf32>
    %c0_25 = arith.constant 0 : index
    %c0_26 = arith.constant 0 : index
    %24 = vector.load %arg7[%c0_25, %c0_26] : memref<32x1xf32, #tpu.memory_space<vmem>>, vector<32x1xf32>
    %25 = vector.broadcast %24 : vector<32x1xf32> to vector<32x4xf32>
    %26 = arith.addf %23, %25 : vector<32x4xf32>
    %cst_27 = arith.constant 0.000000e+00 : f32
    %27 = vector.broadcast %cst_27 : f32 to vector<32x4xf32>
    %28 = arith.maximumf %26, %27 : vector<32x4xf32>
    %c0_28 = arith.constant 0 : index
    %c0_29 = arith.constant 0 : index
    %29 = vector.load %arg8[%c0_28, %c0_29] : memref<32x32xf32, #tpu.memory_space<vmem>>, vector<32x32xf32>
    %cst_30 = arith.constant dense<0.000000e+00> : vector<32x4xf32>
    %30 = tpu.matmul %29, %28, %cst_30 {dimension_numbers = #tpu.dot_dimension_numbers<[1], [0], [0], [1], [0, 0, 1, 1], [], []>} : vector<32x32xf32>, vector<32x4xf32>, vector<32x4xf32> -> vector<32x4xf32>
    %c0_31 = arith.constant 0 : index
    %c0_32 = arith.constant 0 : index
    %31 = vector.load %arg9[%c0_31, %c0_32] : memref<32x1xf32, #tpu.memory_space<vmem>>, vector<32x1xf32>
    %32 = vector.broadcast %31 : vector<32x1xf32> to vector<32x4xf32>
    %33 = arith.addf %30, %32 : vector<32x4xf32>
    %cst_33 = arith.constant 0.000000e+00 : f32
    %34 = vector.broadcast %cst_33 : f32 to vector<32x4xf32>
    %35 = arith.maximumf %33, %34 : vector<32x4xf32>
    %cst_34 = arith.constant dense<0.000000e+00> : vector<32xf32>
    %36 = vector.multi_reduction <add>, %35, %cst_34 [1] : vector<32x4xf32> to vector<32xf32>
    %37 = vector.shape_cast %36 : vector<32xf32> to vector<32x1xf32>
    %cst_35 = arith.constant 4.000000e+00 : f32
    %38 = vector.broadcast %cst_35 : f32 to vector<32x1xf32>
    %39 = arith.divf %37, %38 : vector<32x1xf32>
    %40 = arith.mulf %39, %39 : vector<32x1xf32>
    %cst_36 = arith.constant dense<0.000000e+00> : vector<1xf32>
    %41 = vector.multi_reduction <add>, %40, %cst_36 [0] : vector<32x1xf32> to vector<1xf32>
    %42 = vector.shape_cast %41 : vector<1xf32> to vector<1x1xf32>
    %cst_37 = arith.constant 1.000000e-24 : f32
    %43 = vector.broadcast %cst_37 : f32 to vector<1x1xf32>
    %44 = arith.maximumf %42, %43 : vector<1x1xf32>
    %45 = math.rsqrt %44 : vector<1x1xf32>
    %46 = vector.broadcast %45 : vector<1x1xf32> to vector<32x1xf32>
    %47 = arith.mulf %39, %46 : vector<32x1xf32>
    %c0_38 = arith.constant 0 : index
    %c0_39 = arith.constant 0 : index
    %c0_40 = arith.constant 0 : index
    %48 = vector.load %arg23[%c0_38, %c0_39, %c0_40] : memref<1x32x1xf32, #tpu.memory_space<vmem>>, vector<1x32x1xf32>
    %49 = vector.shape_cast %48 : vector<1x32x1xf32> to vector<32x1xf32>
    %50 = vector.shape_cast %47 : vector<32x1xf32> to vector<1x32x1xf32>
    tpu.vector_store %arg23[%c0_38, %c0_39, %c0_40], %50 {strides = array<i32>} : memref<1x32x1xf32, #tpu.memory_space<vmem>>, vector<1x32x1xf32>,
    %c0_41 = arith.constant 0 : index
    %c0_42 = arith.constant 0 : index
    %51 = vector.load %arg19[%c0_41, %c0_42] : memref<16x64xf32, #tpu.memory_space<vmem>>, vector<16x64xf32>
    %cst_43 = arith.constant dense<0.000000e+00> : vector<16x64xf32>
    %52 = tpu.matmul %19, %51, %cst_43 {dimension_numbers = #tpu.dot_dimension_numbers<[1], [0], [0], [1], [0, 0, 1, 1], [], []>} : vector<16x16xf32>, vector<16x64xf32>, vector<16x64xf32> -> vector<16x64xf32>
    %53 = tpu.concatenate %28, %35 in 0 : vector<32x4xf32>, vector<32x4xf32> -> vector<64x4xf32>
    %c0_44 = arith.constant 0 : index
    %c0_45 = arith.constant 0 : index
    %54 = vector.load %arg20[%c0_44, %c0_45] : memref<4x64xf32, #tpu.memory_space<vmem>>, vector<4x64xf32>
    %cst_46 = arith.constant dense<0.000000e+00> : vector<64x64xf32>
    %55 = tpu.matmul %53, %54, %cst_46 {dimension_numbers = #tpu.dot_dimension_numbers<[1], [0], [0], [1], [0, 0, 1, 1], [], []>} : vector<64x4xf32>, vector<4x64xf32>, vector<64x64xf32> -> vector<64x64xf32>
    %c0_47 = arith.constant 0 : index
    %c0_48 = arith.constant 0 : index
    %56 = vector.load %arg10[%c0_47, %c0_48] : memref<32x8xf32, #tpu.memory_space<vmem>>, vector<32x8xf32>
    %cst_49 = arith.constant dense<0.000000e+00> : vector<32x64xf32>
    %57 = tpu.matmul %56, %10, %cst_49 {dimension_numbers = #tpu.dot_dimension_numbers<[1], [0], [0], [1], [0, 0, 1, 1], [], []>} : vector<32x8xf32>, vector<8x64xf32>, vector<32x64xf32> -> vector<32x64xf32>
    %c0_50 = arith.constant 0 : index
    %c0_51 = arith.constant 0 : index
    %58 = vector.load %arg11[%c0_50, %c0_51] : memref<32x16xf32, #tpu.memory_space<vmem>>, vector<32x16xf32>
    %cst_52 = arith.constant dense<0.000000e+00> : vector<32x64xf32>
    %59 = tpu.matmul %58, %52, %cst_52 {dimension_numbers = #tpu.dot_dimension_numbers<[1], [0], [0], [1], [0, 0, 1, 1], [], []>} : vector<32x16xf32>, vector<16x64xf32>, vector<32x64xf32> -> vector<32x64xf32>
    %60 = arith.addf %57, %59 : vector<32x64xf32>
    %c0_53 = arith.constant 0 : index
    %c0_54 = arith.constant 0 : index
    %61 = vector.load %arg12[%c0_53, %c0_54] : memref<32x64xf32, #tpu.memory_space<vmem>>, vector<32x64xf32>
    %cst_55 = arith.constant dense<0.000000e+00> : vector<32x64xf32>
    %62 = tpu.matmul %61, %55, %cst_55 {dimension_numbers = #tpu.dot_dimension_numbers<[1], [0], [0], [1], [0, 0, 1, 1], [], []>} : vector<32x64xf32>, vector<64x64xf32>, vector<32x64xf32> -> vector<32x64xf32>
    %63 = arith.addf %60, %62 : vector<32x64xf32>
    %c0_56 = arith.constant 0 : index
    %c0_57 = arith.constant 0 : index
    %64 = vector.load %arg13[%c0_56, %c0_57] : memref<32x1xf32, #tpu.memory_space<vmem>>, vector<32x1xf32>
    %65 = vector.broadcast %64 : vector<32x1xf32> to vector<32x64xf32>
    %66 = arith.addf %63, %65 : vector<32x64xf32>
    %cst_58 = arith.constant 0.000000e+00 : f32
    %67 = vector.broadcast %cst_58 : f32 to vector<32x64xf32>
    %68 = arith.maximumf %66, %67 : vector<32x64xf32>
    %c0_59 = arith.constant 0 : index
    %c0_60 = arith.constant 0 : index
    %69 = vector.load %arg14[%c0_59, %c0_60] : memref<3x32xf32, #tpu.memory_space<vmem>>, vector<3x32xf32>
    %cst_61 = arith.constant dense<0.000000e+00> : vector<3x64xf32>
    %70 = tpu.matmul %69, %68, %cst_61 {dimension_numbers = #tpu.dot_dimension_numbers<[1], [0], [0], [1], [0, 0, 1, 1], [], []>} : vector<3x32xf32>, vector<32x64xf32>, vector<3x64xf32> -> vector<3x64xf32>
    %c0_62 = arith.constant 0 : index
    %c0_63 = arith.constant 0 : index
    %71 = vector.load %arg15[%c0_62, %c0_63] : memref<3x1xf32, #tpu.memory_space<vmem>>, vector<3x1xf32>
    %72 = vector.broadcast %71 : vector<3x1xf32> to vector<3x64xf32>
    %73 = arith.addf %70, %72 : vector<3x64xf32>
    %c0_64 = arith.constant 0 : index
    %c0_65 = arith.constant 0 : index
    %74 = vector.load %arg21[%c0_64, %c0_65] : memref<64x256xf32, #tpu.memory_space<vmem>>, vector<64x256xf32>
    %cst_66 = arith.constant dense<0.000000e+00> : vector<3x256xf32>
    %75 = tpu.matmul %73, %74, %cst_66 {dimension_numbers = #tpu.dot_dimension_numbers<[1], [0], [0], [1], [0, 0, 1, 1], [], []>} : vector<3x64xf32>, vector<64x256xf32>, vector<3x256xf32> -> vector<3x256xf32>
    %c0_67 = arith.constant 0 : index
    %c0_68 = arith.constant 0 : index
    %c0_69 = arith.constant 0 : index
    %76 = vector.load %arg22[%c0_67, %c0_68, %c0_69] : memref<1x3x256xf32, #tpu.memory_space<vmem>>, vector<1x3x256xf32>
    %77 = vector.shape_cast %76 : vector<1x3x256xf32> to vector<3x256xf32>
    %78 = vector.shape_cast %75 : vector<3x256xf32> to vector<1x3x256xf32>
    tpu.vector_store %arg22[%c0_67, %c0_68, %c0_69], %78 {strides = array<i32>} : memref<1x3x256xf32, #tpu.memory_space<vmem>>, vector<1x3x256xf32>,
    return
  }
  func.func @transform_0(%arg0: i32) -> (i32, i32, i32) {
    %c0_i32 = arith.constant 0 : i32
    %c0_i32_0 = arith.constant 0 : i32
    %c0_i32_1 = arith.constant 0 : i32
    return %arg0, %c0_i32, %c0_i32_0 : i32, i32, i32
  }
  func.func @transform_1(%arg0: i32) -> (i32, i32) {
    %c0_i32 = arith.constant 0 : i32
    %c0_i32_0 = arith.constant 0 : i32
    %c0_i32_1 = arith.constant 0 : i32
    return %c0_i32, %c0_i32_0 : i32, i32
  }
  func.func @transform_2(%arg0: i32) -> (i32, i32) {
    %c0_i32 = arith.constant 0 : i32
    %c0_i32_0 = arith.constant 0 : i32
    %c0_i32_1 = arith.constant 0 : i32
    return %c0_i32, %c0_i32_0 : i32, i32
  }
  func.func @transform_3(%arg0: i32) -> (i32, i32) {
    %c0_i32 = arith.constant 0 : i32
    %c0_i32_0 = arith.constant 0 : i32
    %c0_i32_1 = arith.constant 0 : i32
    return %c0_i32, %c0_i32_0 : i32, i32
  }
  func.func @transform_4(%arg0: i32) -> (i32, i32) {
    %c0_i32 = arith.constant 0 : i32
    %c0_i32_0 = arith.constant 0 : i32
    %c0_i32_1 = arith.constant 0 : i32
    return %c0_i32, %c0_i32_0 : i32, i32
  }
  func.func @transform_5(%arg0: i32) -> (i32, i32) {
    %c0_i32 = arith.constant 0 : i32
    %c0_i32_0 = arith.constant 0 : i32
    %c0_i32_1 = arith.constant 0 : i32
    return %c0_i32, %c0_i32_0 : i32, i32
  }
  func.func @transform_6(%arg0: i32) -> (i32, i32) {
    %c0_i32 = arith.constant 0 : i32
    %c0_i32_0 = arith.constant 0 : i32
    %c0_i32_1 = arith.constant 0 : i32
    return %c0_i32, %c0_i32_0 : i32, i32
  }
  func.func @transform_7(%arg0: i32) -> (i32, i32) {
    %c0_i32 = arith.constant 0 : i32
    %c0_i32_0 = arith.constant 0 : i32
    %c0_i32_1 = arith.constant 0 : i32
    return %c0_i32, %c0_i32_0 : i32, i32
  }
  func.func @transform_8(%arg0: i32) -> (i32, i32) {
    %c0_i32 = arith.constant 0 : i32
    %c0_i32_0 = arith.constant 0 : i32
    %c0_i32_1 = arith.constant 0 : i32
    return %c0_i32, %c0_i32_0 : i32, i32
  }
  func.func @transform_9(%arg0: i32) -> (i32, i32) {
    %c0_i32 = arith.constant 0 : i32
    %c0_i32_0 = arith.constant 0 : i32
    %c0_i32_1 = arith.constant 0 : i32
    return %c0_i32, %c0_i32_0 : i32, i32
  }
  func.func @transform_10(%arg0: i32) -> (i32, i32) {
    %c0_i32 = arith.constant 0 : i32
    %c0_i32_0 = arith.constant 0 : i32
    %c0_i32_1 = arith.constant 0 : i32
    return %c0_i32, %c0_i32_0 : i32, i32
  }
  func.func @transform_11(%arg0: i32) -> (i32, i32) {
    %c0_i32 = arith.constant 0 : i32
    %c0_i32_0 = arith.constant 0 : i32
    %c0_i32_1 = arith.constant 0 : i32
    return %c0_i32, %c0_i32_0 : i32, i32
  }
  func.func @transform_12(%arg0: i32) -> (i32, i32) {
    %c0_i32 = arith.constant 0 : i32
    %c0_i32_0 = arith.constant 0 : i32
    %c0_i32_1 = arith.constant 0 : i32
    return %c0_i32, %c0_i32_0 : i32, i32
  }
  func.func @transform_13(%arg0: i32) -> (i32, i32) {
    %c0_i32 = arith.constant 0 : i32
    %c0_i32_0 = arith.constant 0 : i32
    %c0_i32_1 = arith.constant 0 : i32
    return %c0_i32, %c0_i32_0 : i32, i32
  }
  func.func @transform_14(%arg0: i32) -> (i32, i32) {
    %c0_i32 = arith.constant 0 : i32
    %c0_i32_0 = arith.constant 0 : i32
    %c0_i32_1 = arith.constant 0 : i32
    return %c0_i32, %c0_i32_0 : i32, i32
  }
  func.func @transform_15(%arg0: i32) -> (i32, i32) {
    %c0_i32 = arith.constant 0 : i32
    %c0_i32_0 = arith.constant 0 : i32
    %c0_i32_1 = arith.constant 0 : i32
    return %c0_i32, %c0_i32_0 : i32, i32
  }
  func.func @transform_16(%arg0: i32) -> (i32, i32) {
    %c0_i32 = arith.constant 0 : i32
    %c0_i32_0 = arith.constant 0 : i32
    %c0_i32_1 = arith.constant 0 : i32
    return %c0_i32, %c0_i32_0 : i32, i32
  }
  func.func @transform_17(%arg0: i32) -> (i32, i32) {
    %c0_i32 = arith.constant 0 : i32
    %c0_i32_0 = arith.constant 0 : i32
    %c0_i32_1 = arith.constant 0 : i32
    return %c0_i32, %c0_i32_0 : i32, i32
  }
  func.func @transform_18(%arg0: i32) -> (i32, i32) {
    %c0_i32 = arith.constant 0 : i32
    %c0_i32_0 = arith.constant 0 : i32
    %c0_i32_1 = arith.constant 0 : i32
    return %c0_i32, %c0_i32_0 : i32, i32
  }
  func.func @transform_19(%arg0: i32) -> (i32, i32) {
    %c0_i32 = arith.constant 0 : i32
    %c0_i32_0 = arith.constant 0 : i32
    %c0_i32_1 = arith.constant 0 : i32
    return %c0_i32, %c0_i32_0 : i32, i32
  }
  func.func @transform_20(%arg0: i32) -> (i32, i32) {
    %c0_i32 = arith.constant 0 : i32
    %c0_i32_0 = arith.constant 0 : i32
    %c0_i32_1 = arith.constant 0 : i32
    return %c0_i32, %c0_i32_0 : i32, i32
  }
  func.func @transform_21(%arg0: i32) -> (i32, i32, i32) {
    %c0_i32 = arith.constant 0 : i32
    %c0_i32_0 = arith.constant 0 : i32
    %c0_i32_1 = arith.constant 0 : i32
    return %arg0, %c0_i32, %c0_i32_0 : i32, i32, i32
  }
  func.func @transform_22(%arg0: i32) -> (i32, i32, i32) {
    %c0_i32 = arith.constant 0 : i32
    %c0_i32_0 = arith.constant 0 : i32
    %c0_i32_1 = arith.constant 0 : i32
    return %arg0, %c0_i32, %c0_i32_0 : i32, i32, i32
  }
}

</mosaic_0001>

<llo_original>
// kernel: _fused_forward.1
$region0: #{_fused_forward.1}
  #allocation0 [shape = 'u32[]', space=smem, size = 0x4, offset = 0x4, fixed_abs, tag = 'smem constant byte address 0x4 - core index']
  #allocation1 [shape = 'u32[72,128]{1,0:T(1,128)}', space=vmem, size = 0x9000, scoped, tag = 'internal scratch']
  %s0 = inlined_call_operand.vmem [shape: f32[2,4,256], index: 0, kind: input, shape index: {}]
  %s1 = inlined_call_operand.vmem [shape: f32[8,4], index: 1, kind: input, shape index: {}]
  %s2 = inlined_call_operand.vmem [shape: f32[8,1], index: 2, kind: input, shape index: {}]
  %s3 = inlined_call_operand.vmem [shape: f32[16,8], index: 3, kind: input, shape index: {}]
  %s4 = inlined_call_operand.vmem [shape: f32[16,1], index: 4, kind: input, shape index: {}]
  %s5 = inlined_call_operand.vmem [shape: f32[32,16], index: 5, kind: input, shape index: {}]
  %s6 = inlined_call_operand.vmem [shape: f32[32,1], index: 6, kind: input, shape index: {}]
  %s7 = inlined_call_operand.vmem [shape: f32[32,32], index: 7, kind: input, shape index: {}]
  %s8 = inlined_call_operand.vmem [shape: f32[32,1], index: 8, kind: input, shape index: {}]
  %s9 = inlined_call_operand.vmem [shape: f32[32,8], index: 9, kind: input, shape index: {}]
  %s10 = inlined_call_operand.vmem [shape: f32[32,16], index: 10, kind: input, shape index: {}]
  %s11 = inlined_call_operand.vmem [shape: f32[32,64], index: 11, kind: input, shape index: {}]
  %s12 = inlined_call_operand.vmem [shape: f32[32,1], index: 12, kind: input, shape index: {}]
  %s13 = inlined_call_operand.vmem [shape: f32[3,32], index: 13, kind: input, shape index: {}]
  %s14 = inlined_call_operand.vmem [shape: f32[3,1], index: 14, kind: input, shape index: {}]
  %s15 = inlined_call_operand.vmem [shape: f32[256,64], index: 15, kind: input, shape index: {}]
  %s16 = inlined_call_operand.vmem [shape: f32[64,16], index: 16, kind: input, shape index: {}]
  %s17 = inlined_call_operand.vmem [shape: f32[16,4], index: 17, kind: input, shape index: {}]
  %s18 = inlined_call_operand.vmem [shape: f32[16,64], index: 18, kind: input, shape index: {}]
  %s19 = inlined_call_operand.vmem [shape: f32[4,64], index: 19, kind: input, shape index: {}]
  %s20 = inlined_call_operand.vmem [shape: f32[64,256], index: 20, kind: input, shape index: {}]
  %s21 = inlined_call_operand.vmem [shape: f32[2,3,256], index: 21, kind: output, shape index: {0}]
  %s22 = inlined_call_operand.vmem [shape: f32[2,32,1], index: 22, kind: output, shape index: {1}]
  %23 = xla_tuple %s21, %s22
  %s24 = sld [smem:[#allocation0]]
  $region125: #{_fused_forward.1} parent=0
    _
  %s26 = ssub.s32 1, %s24
  %s27 = scalar_select 0, %s26, %s24
  loop: start=0, step=1, limit=4
  $region2: #{_fused_forward.1} parent=0 // loop_pre_header
    _
  $region3: #{_fused_forward.1} parent=0 // loop_header
    %s29 = sphi 0, %s33
    %p30 = scmp.ge.s32.totalorder %s29, 4
    %s39 = sphi 0, %s41
    %s42 = sphi 0, %s39
    %s43 = sphi 0, %s42
    %s59 = sphi 0, %s43
    %s63 = sphi 0, %s63
    %s65 = sphi 0, %s63
    %s66 = sphi 0, %s65
    %s80 = sphi 0, %s66
    %s84 = sphi 0, %s84
    %s86 = sphi 0, %s84
    %s87 = sphi 0, %s86
    %s101 = sphi 0, %s87
    %s105 = sphi 0, %s105
    %s107 = sphi 0, %s105
    %s108 = sphi 0, %s107
    %s122 = sphi 0, %s108
    %s126 = sphi 0, %s126
    %s128 = sphi 0, %s126
    %s129 = sphi 0, %s128
    %s143 = sphi 0, %s129
    %s147 = sphi 0, %s147
    %s149 = sphi 0, %s147
    %s150 = sphi 0, %s149
    %s164 = sphi 0, %s150
    %s168 = sphi 0, %s168
    %s170 = sphi 0, %s168
    %s171 = sphi 0, %s170
    %s185 = sphi 0, %s171
    %s189 = sphi 0, %s189
    %s191 = sphi 0, %s189
    %s192 = sphi 0, %s191
    %s206 = sphi 0, %s192
    %s210 = sphi 0, %s210
    %s212 = sphi 0, %s210
    %s213 = sphi 0, %s212
    %s227 = sphi 0, %s213
    %s231 = sphi 0, %s231
    %s233 = sphi 0, %s231
    %s234 = sphi 0, %s233
    %s248 = sphi 0, %s234
    %s252 = sphi 0, %s252
    %s254 = sphi 0, %s252
    %s255 = sphi 0, %s254
    %s269 = sphi 0, %s255
    %s273 = sphi 0, %s273
    %s275 = sphi 0, %s273
    %s276 = sphi 0, %s275
    %s290 = sphi 0, %s276
    %s294 = sphi 0, %s294
    %s296 = sphi 0, %s294
    %s297 = sphi 0, %s296
    %s311 = sphi 0, %s297
    %s315 = sphi 0, %s315
    %s317 = sphi 0, %s315
    %s318 = sphi 0, %s317
    %s332 = sphi 0, %s318
    %s336 = sphi 0, %s336
    %s338 = sphi 0, %s336
    %s339 = sphi 0, %s338
    %s353 = sphi 0, %s339
    %s357 = sphi 0, %s357
    %s359 = sphi 0, %s357
    %s360 = sphi 0, %s359
    %s374 = sphi 0, %s360
    %s378 = sphi 0, %s378
    %s380 = sphi 0, %s378
    %s381 = sphi 0, %s380
    %s395 = sphi 0, %s381
    %s399 = sphi 0, %s399
    %s401 = sphi 0, %s399
    %s402 = sphi 0, %s401
    %s416 = sphi 0, %s402
    %s420 = sphi 0, %s420
    %s422 = sphi 0, %s420
    %s423 = sphi 0, %s422
    %s437 = sphi 0, %s423
    %s441 = sphi 0, %s441
    %s443 = sphi 0, %s441
    %s444 = sphi 0, %s443
    %s458 = sphi 0, %s444
    %s462 = sphi 0, %s462
    %s464 = sphi 0, %s462
    %s465 = sphi 0, %s464
    %s479 = sphi 0, %s465
    %s485 = sphi 0, %s487
    %s488 = sphi 0, %s485
    %s489 = sphi 0, %s488
    %s505 = sphi 0, %s489
    %s511 = sphi 0, %s513
    %s514 = sphi 0, %s511
    %s515 = sphi 0, %s514
    %s531 = sphi 0, %s515
  $region4: #{_fused_forward.1} parent=0 // loop_header_branch
    %32 = sbr.rel (%p30) target = $region8
  $region5: #{_fused_forward.1} parent=0 // loop_body
    %s34 = ssub.s32 %s29, 1
    %s35 = ssub.s32 %s29, 2
    %s36 = sadd.s32 %s29, 1
    %s37 = ssub.s32 %s29, %s36
    %p38 = scmp.eq.s32.totalorder %s37, 0
    %s40 = sadd.s32 %s39, 1
    %s41 = scalar_select %p38, %s39, %s40
    %p44 = pneg %p38
    %p45 = scmp.eq.s32.totalorder %s29, 1
    %p46 = por %p44, %p45
    %p47 = scmp.ne.s32.totalorder %s39, %s42
    %p48 = scmp.eq.s32.totalorder %s29, 0
    %p49 = por %p47, %p48
    %p50 = scmp.ne.s32.totalorder %s39, %s42
    %p51 = scmp.eq.s32.totalorder %s34, 1
    %p52 = por %p50, %p51
    %p53 = scmp.ne.s32.totalorder %s42, %s43
    %p54 = scmp.eq.s32.totalorder %s34, 0
    %p55 = por %p53, %p54
    %p56 = scmp.ne.s32.totalorder %s42, %s43
    %p57 = scmp.eq.s32.totalorder %s35, 1
    %p58 = por %p56, %p57
    %p60 = scmp.ne.s32.totalorder %s43, %s59
    %p61 = scmp.eq.s32.totalorder %s35, 0
    %p62 = por %p60, %p61
    %s64 = sadd.s32 %s63, 1
    %p67 = scmp.eq.s32.totalorder %s29, 1
    %p68 = scmp.ne.s32.totalorder %s63, %s65
    %p69 = scmp.eq.s32.totalorder %s29, 0
    %p70 = por %p68, %p69
    %p71 = scmp.ne.s32.totalorder %s63, %s65
    %p72 = scmp.eq.s32.totalorder %s34, 1
    %p73 = por %p71, %p72
    %p74 = scmp.ne.s32.totalorder %s65, %s66
    %p75 = scmp.eq.s32.totalorder %s34, 0
    %p76 = por %p74, %p75
    %p77 = scmp.ne.s32.totalorder %s65, %s66
    %p78 = scmp.eq.s32.totalorder %s35, 1
    %p79 = por %p77, %p78
    %p81 = scmp.ne.s32.totalorder %s66, %s80
    %p82 = scmp.eq.s32.totalorder %s35, 0
    %p83 = por %p81, %p82
    %s85 = sadd.s32 %s84, 1
    %p88 = scmp.eq.s32.totalorder %s29, 1
    %p89 = scmp.ne.s32.totalorder %s84, %s86
    %p90 = scmp.eq.s32.totalorder %s29, 0
    %p91 = por %p89, %p90
    %p92 = scmp.ne.s32.totalorder %s84, %s86
    %p93 = scmp.eq.s32.totalorder %s34, 1
    %p94 = por %p92, %p93
    %p95 = scmp.ne.s32.totalorder %s86, %s87
    %p96 = scmp.eq.s32.totalorder %s34, 0
    %p97 = por %p95, %p96
    %p98 = scmp.ne.s32.totalorder %s86, %s87
    %p99 = scmp.eq.s32.totalorder %s35, 1
    %p100 = por %p98, %p99
    %p102 = scmp.ne.s32.totalorder %s87, %s101
    %p103 = scmp.eq.s32.totalorder %s35, 0
    %p104 = por %p102, %p103
    %s106 = sadd.s32 %s105, 1
    %p109 = scmp.eq.s32.totalorder %s29, 1
    %p110 = scmp.ne.s32.totalorder %s105, %s107
    %p111 = scmp.eq.s32.totalorder %s29, 0
    %p112 = por %p110, %p111
    %p113 = scmp.ne.s32.totalorder %s105, %s107
    %p114 = scmp.eq.s32.totalorder %s34, 1
    %p115 = por %p113, %p114
    %p116 = scmp.ne.s32.totalorder %s107, %s108
    %p117 = scmp.eq.s32.totalorder %s34, 0
    %p118 = por %p116, %p117
    %p119 = scmp.ne.s32.totalorder %s107, %s108
    %p120 = scmp.eq.s32.totalorder %s35, 1
    %p121 = por %p119, %p120
    %p123 = scmp.ne.s32.totalorder %s108, %s122
    %p124 = scmp.eq.s32.totalorder %s35, 0
    %p125 = por %p123, %p124
    %s127 = sadd.s32 %s126, 1
    %p130 = scmp.eq.s32.totalorder %s29, 1
    %p131 = scmp.ne.s32.totalorder %s126, %s128
    %p132 = scmp.eq.s32.totalorder %s29, 0
    %p133 = por %p131, %p132
    %p134 = scmp.ne.s32.totalorder %s126, %s128
    %p135 = scmp.eq.s32.totalorder %s34, 1
    %p136 = por %p134, %p135
    %p137 = scmp.ne.s32.totalorder %s128, %s129
    %p138 = scmp.eq.s32.totalorder %s34, 0
    %p139 = por %p137, %p138
    %p140 = scmp.ne.s32.totalorder %s128, %s129
    %p141 = scmp.eq.s32.totalorder %s35, 1
    %p142 = por %p140, %p141
    %p144 = scmp.ne.s32.totalorder %s129, %s143
    %p145 = scmp.eq.s32.totalorder %s35, 0
    %p146 = por %p144, %p145
    %s148 = sadd.s32 %s147, 1
    %p151 = scmp.eq.s32.totalorder %s29, 1
    %p152 = scmp.ne.s32.totalorder %s147, %s149
    %p153 = scmp.eq.s32.totalorder %s29, 0
    %p154 = por %p152, %p153
    %p155 = scmp.ne.s32.totalorder %s147, %s149
    %p156 = scmp.eq.s32.totalorder %s34, 1
    %p157 = por %p155, %p156
    %p158 = scmp.ne.s32.totalorder %s149, %s150
    %p159 = scmp.eq.s32.totalorder %s34, 0
    %p160 = por %p158, %p159
    %p161 = scmp.ne.s32.totalorder %s149, %s150
    %p162 = scmp.eq.s32.totalorder %s35, 1
    %p163 = por %p161, %p162
    %p165 = scmp.ne.s32.totalorder %s150, %s164
    %p166 = scmp.eq.s32.totalorder %s35, 0
    %p167 = por %p165, %p166
    %s169 = sadd.s32 %s168, 1
    %p172 = scmp.eq.s32.totalorder %s29, 1
    %p173 = scmp.ne.s32.totalorder %s168, %s170
    %p174 = scmp.eq.s32.totalorder %s29, 0
    %p175 = por %p173, %p174
    %p176 = scmp.ne.s32.totalorder %s168, %s170
    %p177 = scmp.eq.s32.totalorder %s34, 1
    %p178 = por %p176, %p177
    %p179 = scmp.ne.s32.totalorder %s170, %s171
    %p180 = scmp.eq.s32.totalorder %s34, 0
    %p181 = por %p179, %p180
    %p182 = scmp.ne.s32.totalorder %s170, %s171
    %p183 = scmp.eq.s32.totalorder %s35, 1
    %p184 = por %p182, %p183
    %p186 = scmp.ne.s32.totalorder %s171, %s185
    %p187 = scmp.eq.s32.totalorder %s35, 0
    %p188 = por %p186, %p187
    %s190 = sadd.s32 %s189, 1
    %p193 = scmp.eq.s32.totalorder %s29, 1
    %p194 = scmp.ne.s32.totalorder %s189, %s191
    %p195 = scmp.eq.s32.totalorder %s29, 0
    %p196 = por %p194, %p195
    %p197 = scmp.ne.s32.totalorder %s189, %s191
    %p198 = scmp.eq.s32.totalorder %s34, 1
    %p199 = por %p197, %p198
    %p200 = scmp.ne.s32.totalorder %s191, %s192
    %p201 = scmp.eq.s32.totalorder %s34, 0
    %p202 = por %p200, %p201
    %p203 = scmp.ne.s32.totalorder %s191, %s192
    %p204 = scmp.eq.s32.totalorder %s35, 1
    %p205 = por %p203, %p204
    %p207 = scmp.ne.s32.totalorder %s192, %s206
    %p208 = scmp.eq.s32.totalorder %s35, 0
    %p209 = por %p207, %p208
    %s211 = sadd.s32 %s210, 1
    %p214 = scmp.eq.s32.totalorder %s29, 1
    %p215 = scmp.ne.s32.totalorder %s210, %s212
    %p216 = scmp.eq.s32.totalorder %s29, 0
    %p217 = por %p215, %p216
    %p218 = scmp.ne.s32.totalorder %s210, %s212
    %p219 = scmp.eq.s32.totalorder %s34, 1
    %p220 = por %p218, %p219
    %p221 = scmp.ne.s32.totalorder %s212, %s213
    %p222 = scmp.eq.s32.totalorder %s34, 0
    %p223 = por %p221, %p222
    %p224 = scmp.ne.s32.totalorder %s212, %s213
    %p225 = scmp.eq.s32.totalorder %s35, 1
    %p226 = por %p224, %p225
    %p228 = scmp.ne.s32.totalorder %s213, %s227
    %p229 = scmp.eq.s32.totalorder %s35, 0
    %p230 = por %p228, %p229
    %s232 = sadd.s32 %s231, 1
    %p235 = scmp.eq.s32.totalorder %s29, 1
    %p236 = scmp.ne.s32.totalorder %s231, %s233
    %p237 = scmp.eq.s32.totalorder %s29, 0
    %p238 = por %p236, %p237
    %p239 = scmp.ne.s32.totalorder %s231, %s233
    %p240 = scmp.eq.s32.totalorder %s34, 1
    %p241 = por %p239, %p240
    %p242 = scmp.ne.s32.totalorder %s233, %s234
    %p243 = scmp.eq.s32.totalorder %s34, 0
    %p244 = por %p242, %p243
    %p245 = scmp.ne.s32.totalorder %s233, %s234
    %p246 = scmp.eq.s32.totalorder %s35, 1
    %p247 = por %p245, %p246
    %p249 = scmp.ne.s32.totalorder %s234, %s248
    %p250 = scmp.eq.s32.totalorder %s35, 0
    %p251 = por %p249, %p250
    %s253 = sadd.s32 %s252, 1
    %p256 = scmp.eq.s32.totalorder %s29, 1
    %p257 = scmp.ne.s32.totalorder %s252, %s254
    %p258 = scmp.eq.s32.totalorder %s29, 0
    %p259 = por %p257, %p258
    %p260 = scmp.ne.s32.totalorder %s252, %s254
    %p261 = scmp.eq.s32.totalorder %s34, 1
    %p262 = por %p260, %p261
    %p263 = scmp.ne.s32.totalorder %s254, %s255
    %p264 = scmp.eq.s32.totalorder %s34, 0
    %p265 = por %p263, %p264
    %p266 = scmp.ne.s32.totalorder %s254, %s255
    %p267 = scmp.eq.s32.totalorder %s35, 1
    %p268 = por %p266, %p267
    %p270 = scmp.ne.s32.totalorder %s255, %s269
    %p271 = scmp.eq.s32.totalorder %s35, 0
    %p272 = por %p270, %p271
    %s274 = sadd.s32 %s273, 1
    %p277 = scmp.eq.s32.totalorder %s29, 1
    %p278 = scmp.ne.s32.totalorder %s273, %s275
    %p279 = scmp.eq.s32.totalorder %s29, 0
    %p280 = por %p278, %p279
    %p281 = scmp.ne.s32.totalorder %s273, %s275
    %p282 = scmp.eq.s32.totalorder %s34, 1
    %p283 = por %p281, %p282
    %p284 = scmp.ne.s32.totalorder %s275, %s276
    %p285 = scmp.eq.s32.totalorder %s34, 0
    %p286 = por %p284, %p285
    %p287 = scmp.ne.s32.totalorder %s275, %s276
    %p288 = scmp.eq.s32.totalorder %s35, 1
    %p289 = por %p287, %p288
    %p291 = scmp.ne.s32.totalorder %s276, %s290
    %p292 = scmp.eq.s32.totalorder %s35, 0
    %p293 = por %p291, %p292
    %s295 = sadd.s32 %s294, 1
    %p298 = scmp.eq.s32.totalorder %s29, 1
    %p299 = scmp.ne.s32.totalorder %s294, %s296
    %p300 = scmp.eq.s32.totalorder %s29, 0
    %p301 = por %p299, %p300
    %p302 = scmp.ne.s32.totalorder %s294, %s296
    %p303 = scmp.eq.s32.totalorder %s34, 1
    %p304 = por %p302, %p303
    %p305 = scmp.ne.s32.totalorder %s296, %s297
    %p306 = scmp.eq.s32.totalorder %s34, 0
    %p307 = por %p305, %p306
    %p308 = scmp.ne.s32.totalorder %s296, %s297
    %p309 = scmp.eq.s32.totalorder %s35, 1
    %p310 = por %p308, %p309
    %p312 = scmp.ne.s32.totalorder %s297, %s311
    %p313 = scmp.eq.s32.totalorder %s35, 0
    %p314 = por %p312, %p313
    %s316 = sadd.s32 %s315, 1
    %p319 = scmp.eq.s32.totalorder %s29, 1
    %p320 = scmp.ne.s32.totalorder %s315, %s317
    %p321 = scmp.eq.s32.totalorder %s29, 0
    %p322 = por %p320, %p321
    %p323 = scmp.ne.s32.totalorder %s315, %s317
    %p324 = scmp.eq.s32.totalorder %s34, 1
    %p325 = por %p323, %p324
    %p326 = scmp.ne.s32.totalorder %s317, %s318
    %p327 = scmp.eq.s32.totalorder %s34, 0
    %p328 = por %p326, %p327
    %p329 = scmp.ne.s32.totalorder %s317, %s318
    %p330 = scmp.eq.s32.totalorder %s35, 1
    %p331 = por %p329, %p330
    %p333 = scmp.ne.s32.totalorder %s318, %s332
    %p334 = scmp.eq.s32.totalorder %s35, 0
    %p335 = por %p333, %p334
    %s337 = sadd.s32 %s336, 1
    %p340 = scmp.eq.s32.totalorder %s29, 1
    %p341 = scmp.ne.s32.totalorder %s336, %s338
    %p342 = scmp.eq.s32.totalorder %s29, 0
    %p343 = por %p341, %p342
    %p344 = scmp.ne.s32.totalorder %s336, %s338
    %p345 = scmp.eq.s32.totalorder %s34, 1
    %p346 = por %p344, %p345
    %p347 = scmp.ne.s32.totalorder %s338, %s339
    %p348 = scmp.eq.s32.totalorder %s34, 0
    %p349 = por %p347, %p348
    %p350 = scmp.ne.s32.totalorder %s338, %s339
    %p351 = scmp.eq.s32.totalorder %s35, 1
    %p352 = por %p350, %p351
    %p354 = scmp.ne.s32.totalorder %s339, %s353
    %p355 = scmp.eq.s32.totalorder %s35, 0
    %p356 = por %p354, %p355
    %s358 = sadd.s32 %s357, 1
    %p361 = scmp.eq.s32.totalorder %s29, 1
    %p362 = scmp.ne.s32.totalorder %s357, %s359
    %p363 = scmp.eq.s32.totalorder %s29, 0
    %p364 = por %p362, %p363
    %p365 = scmp.ne.s32.totalorder %s357, %s359
    %p366 = scmp.eq.s32.totalorder %s34, 1
    %p367 = por %p365, %p366
    %p368 = scmp.ne.s32.totalorder %s359, %s360
    %p369 = scmp.eq.s32.totalorder %s34, 0
    %p370 = por %p368, %p369
    %p371 = scmp.ne.s32.totalorder %s359, %s360
    %p372 = scmp.eq.s32.totalorder %s35, 1
    %p373 = por %p371, %p372
    %p375 = scmp.ne.s32.totalorder %s360, %s374
    %p376 = scmp.eq.s32.totalorder %s35, 0
    %p377 = por %p375, %p376
    %s379 = sadd.s32 %s378, 1
    %p382 = scmp.eq.s32.totalorder %s29, 1
    %p383 = scmp.ne.s32.totalorder %s378, %s380
    %p384 = scmp.eq.s32.totalorder %s29, 0
    %p385 = por %p383, %p384
    %p386 = scmp.ne.s32.totalorder %s378, %s380
    %p387 = scmp.eq.s32.totalorder %s34, 1
    %p388 = por %p386, %p387
    %p389 = scmp.ne.s32.totalorder %s380, %s381
    %p390 = scmp.eq.s32.totalorder %s34, 0
    %p391 = por %p389, %p390
    %p392 = scmp.ne.s32.totalorder %s380, %s381
    %p393 = scmp.eq.s32.totalorder %s35, 1
    %p394 = por %p392, %p393
    %p396 = scmp.ne.s32.totalorder %s381, %s395
    %p397 = scmp.eq.s32.totalorder %s35, 0
    %p398 = por %p396, %p397
    %s400 = sadd.s32 %s399, 1
    %p403 = scmp.eq.s32.totalorder %s29, 1
    %p404 = scmp.ne.s32.totalorder %s399, %s401
    %p405 = scmp.eq.s32.totalorder %s29, 0
    %p406 = por %p404, %p405
    %p407 = scmp.ne.s32.totalorder %s399, %s401
    %p408 = scmp.eq.s32.totalorder %s34, 1
    %p409 = por %p407, %p408
    %p410 = scmp.ne.s32.totalorder %s401, %s402
    %p411 = scmp.eq.s32.totalorder %s34, 0
    %p412 = por %p410, %p411
    %p413 = scmp.ne.s32.totalorder %s401, %s402
    %p414 = scmp.eq.s32.totalorder %s35, 1
    %p415 = por %p413, %p414
    %p417 = scmp.ne.s32.totalorder %s402, %s416
    %p418 = scmp.eq.s32.totalorder %s35, 0
    %p419 = por %p417, %p418
    %s421 = sadd.s32 %s420, 1
    %p424 = scmp.eq.s32.totalorder %s29, 1
    %p425 = scmp.ne.s32.totalorder %s420, %s422
    %p426 = scmp.eq.s32.totalorder %s29, 0
    %p427 = por %p425, %p426
    %p428 = scmp.ne.s32.totalorder %s420, %s422
    %p429 = scmp.eq.s32.totalorder %s34, 1
    %p430 = por %p428, %p429
    %p431 = scmp.ne.s32.totalorder %s422, %s423
    %p432 = scmp.eq.s32.totalorder %s34, 0
    %p433 = por %p431, %p432
    %p434 = scmp.ne.s32.totalorder %s422, %s423
    %p435 = scmp.eq.s32.totalorder %s35, 1
    %p436 = por %p434, %p435
    %p438 = scmp.ne.s32.totalorder %s423, %s437
    %p439 = scmp.eq.s32.totalorder %s35, 0
    %p440 = por %p438, %p439
    %s442 = sadd.s32 %s441, 1
    %p445 = scmp.eq.s32.totalorder %s29, 1
    %p446 = scmp.ne.s32.totalorder %s441, %s443
    %p447 = scmp.eq.s32.totalorder %s29, 0
    %p448 = por %p446, %p447
    %p449 = scmp.ne.s32.totalorder %s441, %s443
    %p450 = scmp.eq.s32.totalorder %s34, 1
    %p451 = por %p449, %p450
    %p452 = scmp.ne.s32.totalorder %s443, %s444
    %p453 = scmp.eq.s32.totalorder %s34, 0
    %p454 = por %p452, %p453
    %p455 = scmp.ne.s32.totalorder %s443, %s444
    %p456 = scmp.eq.s32.totalorder %s35, 1
    %p457 = por %p455, %p456
    %p459 = scmp.ne.s32.totalorder %s444, %s458
    %p460 = scmp.eq.s32.totalorder %s35, 0
    %p461 = por %p459, %p460
    %s463 = sadd.s32 %s462, 1
    %p466 = scmp.eq.s32.totalorder %s29, 1
    %p467 = scmp.ne.s32.totalorder %s462, %s464
    %p468 = scmp.eq.s32.totalorder %s29, 0
    %p469 = por %p467, %p468
    %p470 = scmp.ne.s32.totalorder %s462, %s464
    %p471 = scmp.eq.s32.totalorder %s34, 1
    %p472 = por %p470, %p471
    %p473 = scmp.ne.s32.totalorder %s464, %s465
    %p474 = scmp.eq.s32.totalorder %s34, 0
    %p475 = por %p473, %p474
    %p476 = scmp.ne.s32.totalorder %s464, %s465
    %p477 = scmp.eq.s32.totalorder %s35, 1
    %p478 = por %p476, %p477
    %p480 = scmp.ne.s32.totalorder %s465, %s479
    %p481 = scmp.eq.s32.totalorder %s35, 0
    %p482 = por %p480, %p481
    %s483 = ssub.s32 %s29, %s36
    %p484 = scmp.eq.s32.totalorder %s483, 0
    %s486 = sadd.s32 %s485, 1
    %s487 = scalar_select %p484, %s485, %s486
    %p490 = pneg %p484
    %p491 = scmp.eq.s32.totalorder %s29, 1
    %p492 = por %p490, %p491
    %p493 = scmp.ne.s32.totalorder %s485, %s488
    %p494 = scmp.eq.s32.totalorder %s29, 0
    %p495 = por %p493, %p494
    %p496 = scmp.ne.s32.totalorder %s485, %s488
    %p497 = scmp.eq.s32.totalorder %s34, 1
    %p498 = por %p496, %p497
    %p499 = scmp.ne.s32.totalorder %s488, %s489
    %p500 = scmp.eq.s32.totalorder %s34, 0
    %p501 = por %p499, %p500
    %p502 = scmp.ne.s32.totalorder %s488, %s489
    %p503 = scmp.eq.s32.totalorder %s35, 1
    %p504 = por %p502, %p503
    %p506 = scmp.ne.s32.totalorder %s489, %s505
    %p507 = scmp.eq.s32.totalorder %s35, 0
    %p508 = por %p506, %p507
    %s509 = ssub.s32 %s29, %s36
    %p510 = scmp.eq.s32.totalorder %s509, 0
    %s512 = sadd.s32 %s511, 1
    %s513 = scalar_select %p510, %s511, %s512
    %p516 = pneg %p510
    %p517 = scmp.eq.s32.totalorder %s29, 1
    %p518 = por %p516, %p517
    %p519 = scmp.ne.s32.totalorder %s511, %s514
    %p520 = scmp.eq.s32.totalorder %s29, 0
    %p521 = por %p519, %p520
    %p522 = scmp.ne.s32.totalorder %s511, %s514
    %p523 = scmp.eq.s32.totalorder %s34, 1
    %p524 = por %p522, %p523
    %p525 = scmp.ne.s32.totalorder %s514, %s515
    %p526 = scmp.eq.s32.totalorder %s34, 0
    %p527 = por %p525, %p526
    %p528 = scmp.ne.s32.totalorder %s514, %s515
    %p529 = scmp.eq.s32.totalorder %s35, 1
    %p530 = por %p528, %p529
    %p532 = scmp.ne.s32.totalorder %s515, %s531
    %p533 = scmp.eq.s32.totalorder %s35, 0
    %p534 = por %p532, %p533
    %p535 = scmp.le.s32.totalorder 1, %s29
    %p536 = scmp.lt.s32.totalorder %s29, 3
    %p537 = pnand %p535, %p536
    %p538 = pneg %p537
    // Predicated region
    $region9: #{_fused_forward.1} parent=5 // pred_check
      _
    $region10: #{_fused_forward.1} parent=5 // pred_check_branch
      %540 = sbr.rel (%p537) target = $region12
    $region11: #{_fused_forward.1} parent=5 // pred_region
      %s541 = ssub.s32 %s29, 1
      // Predicated region
      $region13: #{_fused_forward.1} parent=11 // pred_check
        %p542 = pneg %p76
      $region14: #{_fused_forward.1} parent=11 // pred_check_branch
        %544 = sbr.rel (%p542) target = $region16
      $region15: #{_fused_forward.1} parent=11 // pred_region
        _
      $region16: #{_fused_forward.1} parent=11 // pred_fallthru
        _
      // Predicated region
      $region17: #{_fused_forward.1} parent=11 // pred_check
        %p545 = pneg %p97
      $region18: #{_fused_forward.1} parent=11 // pred_check_branch
        %547 = sbr.rel (%p545) target = $region20
      $region19: #{_fused_forward.1} parent=11 // pred_region
        _
      $region20: #{_fused_forward.1} parent=11 // pred_fallthru
        _
      // Predicated region
      $region21: #{_fused_forward.1} parent=11 // pred_check
        %p548 = pneg %p118
      $region22: #{_fused_forward.1} parent=11 // pred_check_branch
        %550 = sbr.rel (%p548) target = $region24
      $region23: #{_fused_forward.1} parent=11 // pred_region
        _
      $region24: #{_fused_forward.1} parent=11 // pred_fallthru
        _
      // Predicated region
      $region25: #{_fused_forward.1} parent=11 // pred_check
        %p551 = pneg %p139
      $region26: #{_fused_forward.1} parent=11 // pred_check_branch
        %553 = sbr.rel (%p551) target = $region28
      $region27: #{_fused_forward.1} parent=11 // pred_region
        _
      $region28: #{_fused_forward.1} parent=11 // pred_fallthru
        _
      // Predicated region
      $region29: #{_fused_forward.1} parent=11 // pred_check
        %p554 = pneg %p160
      $region30: #{_fused_forward.1} parent=11 // pred_check_branch
        %556 = sbr.rel (%p554) target = $region32
      $region31: #{_fused_forward.1} parent=11 // pred_region
        _
      $region32: #{_fused_forward.1} parent=11 // pred_fallthru
        _
      // Predicated region
      $region33: #{_fused_forward.1} parent=11 // pred_check
        %p557 = pneg %p181
      $region34: #{_fused_forward.1} parent=11 // pred_check_branch
        %559 = sbr.rel (%p557) target = $region36
      $region35: #{_fused_forward.1} parent=11 // pred_region
        _
      $region36: #{_fused_forward.1} parent=11 // pred_fallthru
        _
      // Predicated region
      $region37: #{_fused_forward.1} parent=11 // pred_check
        %p560 = pneg %p202
      $region38: #{_fused_forward.1} parent=11 // pred_check_branch
        %562 = sbr.rel (%p560) target = $region40
      $region39: #{_fused_forward.1} parent=11 // pred_region
        _
      $region40: #{_fused_forward.1} parent=11 // pred_fallthru
        _
      // Predicated region
      $region41: #{_fused_forward.1} parent=11 // pred_check
        %p563 = pneg %p223
      $region42: #{_fused_forward.1} parent=11 // pred_check_branch
        %565 = sbr.rel (%p563) target = $region44
      $region43: #{_fused_forward.1} parent=11 // pred_region
        _
      $region44: #{_fused_forward.1} parent=11 // pred_fallthru
        _
      // Predicated region
      $region45: #{_fused_forward.1} parent=11 // pred_check
        %p566 = pneg %p244
      $region46: #{_fused_forward.1} parent=11 // pred_check_branch
        %568 = sbr.rel (%p566) target = $region48
      $region47: #{_fused_forward.1} parent=11 // pred_region
        _
      $region48: #{_fused_forward.1} parent=11 // pred_fallthru
        _
      // Predicated region
      $region49: #{_fused_forward.1} parent=11 // pred_check
        %p569 = pneg %p265
      $region50: #{_fused_forward.1} parent=11 // pred_check_branch
        %571 = sbr.rel (%p569) target = $region52
      $region51: #{_fused_forward.1} parent=11 // pred_region
        _
      $region52: #{_fused_forward.1} parent=11 // pred_fallthru
        _
      // Predicated region
      $region53: #{_fused_forward.1} parent=11 // pred_check
        %p572 = pneg %p286
      $region54: #{_fused_forward.1} parent=11 // pred_check_branch
        %574 = sbr.rel (%p572) target = $region56
      $region55: #{_fused_forward.1} parent=11 // pred_region
        _
      $region56: #{_fused_forward.1} parent=11 // pred_fallthru
        _
      // Predicated region
      $region57: #{_fused_forward.1} parent=11 // pred_check
        %p575 = pneg %p307
      $region58: #{_fused_forward.1} parent=11 // pred_check_branch
        %577 = sbr.rel (%p575) target = $region60
      $region59: #{_fused_forward.1} parent=11 // pred_region
        _
      $region60: #{_fused_forward.1} parent=11 // pred_fallthru
        _
      // Predicated region
      $region61: #{_fused_forward.1} parent=11 // pred_check
        %p578 = pneg %p328
      $region62: #{_fused_forward.1} parent=11 // pred_check_branch
        %580 = sbr.rel (%p578) target = $region64
      $region63: #{_fused_forward.1} parent=11 // pred_region
        _
      $region64: #{_fused_forward.1} parent=11 // pred_fallthru
        _
      // Predicated region
      $region65: #{_fused_forward.1} parent=11 // pred_check
        %p581 = pneg %p349
      $region66: #{_fused_forward.1} parent=11 // pred_check_branch
        %583 = sbr.rel (%p581) target = $region68
      $region67: #{_fused_forward.1} parent=11 // pred_region
        _
      $region68: #{_fused_forward.1} parent=11 // pred_fallthru
        _
      // Predicated region
      $region69: #{_fused_forward.1} parent=11 // pred_check
        %p584 = pneg %p370
      $region70: #{_fused_forward.1} parent=11 // pred_check_branch
        %586 = sbr.rel (%p584) target = $region72
      $region71: #{_fused_forward.1} parent=11 // pred_region
        _
      $region72: #{_fused_forward.1} parent=11 // pred_fallthru
        _
      // Predicated region
      $region73: #{_fused_forward.1} parent=11 // pred_check
        %p587 = pneg %p391
      $region74: #{_fused_forward.1} parent=11 // pred_check_branch
        %589 = sbr.rel (%p587) target = $region76
      $region75: #{_fused_forward.1} parent=11 // pred_region
        _
      $region76: #{_fused_forward.1} parent=11 // pred_fallthru
        _
      // Predicated region
      $region77: #{_fused_forward.1} parent=11 // pred_check
        %p590 = pneg %p412
      $region78: #{_fused_forward.1} parent=11 // pred_check_branch
        %592 = sbr.rel (%p590) target = $region80
      $region79: #{_fused_forward.1} parent=11 // pred_region
        _
      $region80: #{_fused_forward.1} parent=11 // pred_fallthru
        _
      // Predicated region
      $region81: #{_fused_forward.1} parent=11 // pred_check
        %p593 = pneg %p433
      $region82: #{_fused_forward.1} parent=11 // pred_check_branch
        %595 = sbr.rel (%p593) target = $region84
      $region83: #{_fused_forward.1} parent=11 // pred_region
        _
      $region84: #{_fused_forward.1} parent=11 // pred_fallthru
        _
      // Predicated region
      $region85: #{_fused_forward.1} parent=11 // pred_check
        %p596 = pneg %p454
      $region86: #{_fused_forward.1} parent=11 // pred_check_branch
        %598 = sbr.rel (%p596) target = $region88
      $region87: #{_fused_forward.1} parent=11 // pred_region
        _
      $region88: #{_fused_forward.1} parent=11 // pred_fallthru
        _
      // Predicated region
      $region89: #{_fused_forward.1} parent=11 // pred_check
        %p599 = pneg %p475
      $region90: #{_fused_forward.1} parent=11 // pred_check_branch
        %601 = sbr.rel (%p599) target = $region92
      $region91: #{_fused_forward.1} parent=11 // pred_region
        _
      $region92: #{_fused_forward.1} parent=11 // pred_fallthru
        _
    $region12: #{_fused_forward.1} parent=5 // pred_fallthru
      _
    %p602 = scmp.lt.s32.totalorder %s29, 2
    // Predicated region
    $region93: #{_fused_forward.1} parent=5 // pred_check
      %p603 = pneg %p602
    $region94: #{_fused_forward.1} parent=5 // pred_check_branch
      %605 = sbr.rel (%p603) target = $region96
    $region95: #{_fused_forward.1} parent=5 // pred_region
      // Predicated region
      $region97: #{_fused_forward.1} parent=95 // pred_check
        %p606 = pneg %p49
      $region98: #{_fused_forward.1} parent=95 // pred_check_branch
        %608 = sbr.rel (%p606) target = $region100
      $region99: #{_fused_forward.1} parent=95 // pred_region
        %p609 = scmp.lt.s32.totalorder %s29, 1
        %s610 = scalar_select %p609, %s29, 1
        %s611 = smul.addr %s610, 2
        %s612 = smul.addr %s611, 4
        %s613 = scalar_lea.vmem %s0, %s612
      $region100: #{_fused_forward.1} parent=95 // pred_fallthru
        _
    $region96: #{_fused_forward.1} parent=5 // pred_fallthru
      _
    %p614 = scmp.le.s32.totalorder 1, %s29
    %p615 = scmp.lt.s32.totalorder %s29, 3
    %p616 = pnand %p614, %p615
    %p617 = pneg %p616
    // Predicated region
    $region101: #{_fused_forward.1} parent=5 // pred_check
      _
    $region102: #{_fused_forward.1} parent=5 // pred_check_branch
      %619 = sbr.rel (%p616) target = $region104
    $region103: #{_fused_forward.1} parent=5 // pred_region
      %s620 = ssub.s32 %s29, 1
      %p621 = scmp.lt.s32.totalorder %s34, 1
      %s622 = scalar_select %p621, %s34, 1
      %s623 = smul.addr %s622, 2
      %s624 = smul.addr %s623, 4
      %s625 = scalar_lea.vmem %s0, %s624
      %p626 = pneg %p55
      %p627 = pneg %p52
      %p628 = pneg %p76
      %p629 = pneg %p73
      %p630 = pneg %p97
      %p631 = pneg %p94
      %p632 = pneg %p118
      %p633 = pneg %p115
      %p634 = pneg %p139
      %p635 = pneg %p136
      %p636 = pneg %p160
      %p637 = pneg %p157
      %p638 = pneg %p181
      %p639 = pneg %p178
      %p640 = pneg %p202
      %p641 = pneg %p199
      %p642 = pneg %p223
      %p643 = pneg %p220
      %p644 = pneg %p244
      %p645 = pneg %p241
      %p646 = pneg %p265
      %p647 = pneg %p262
      %p648 = pneg %p286
      %p649 = pneg %p283
      %p650 = pneg %p307
      %p651 = pneg %p304
      %p652 = pneg %p328
      %p653 = pneg %p325
      %p654 = pneg %p349
      %p655 = pneg %p346
      %p656 = pneg %p370
      %p657 = pneg %p367
      %p658 = pneg %p391
      %p659 = pneg %p388
      %p660 = pneg %p412
      %p661 = pneg %p409
      %p662 = pneg %p433
      %p663 = pneg %p430
      %p664 = pneg %p454
      %p665 = pneg %p451
      %p666 = pneg %p475
      %p667 = pneg %p472
      %p668 = pneg %p501
      %p669 = pneg %p498
      %p670 = scmp.lt.s32.totalorder %s34, 1
      %s671 = scalar_select %p670, %s34, 1
      %s672 = smul.addr %s671, 2
      %s673 = smul.addr %s672, 4
      %s674 = scalar_lea.vmem %s21, %s673
      %p675 = pneg %p527
      %p676 = pneg %p524
      %p677 = scmp.lt.s32.totalorder %s34, 1
      %s678 = scalar_select %p677, %s34, 1
      %s679 = smul.addr %s678, 4
      %s680 = smul.addr %s679, 8
      %s681 = scalar_lea.vmem %s22, %s680
      %p682 = scmp.lt.s32.totalorder %s34, 1
      %s683 = scalar_select %p682, %s34, 1
      %s684 = smul.addr %s683, 2
      %s685 = smul.addr %s684, 4
      %s686 = scalar_lea.vmem %s0, %s685
      %p687 = scmp.lt.s32.totalorder %s34, 1
      %s688 = scalar_select %p687, %s34, 1
      %s689 = smul.addr %s688, 2
      %s690 = smul.addr %s689, 4
      %s691 = scalar_lea.vmem %s21, %s690
      %p692 = scmp.lt.s32.totalorder %s34, 1
      %s693 = scalar_select %p692, %s34, 1
      %s694 = smul.addr %s693, 4
      %s695 = smul.addr %s694, 8
      %s696 = scalar_lea.vmem %s22, %s695
      %v697 = vld [vmem:[%s686] sm:$0xff]
      %v698 = vld [vmem:[%s1] sm:$0xff]
      %v699 = vld [vmem:[%s15] sm:$0xff]
      %v700 = vld [vmem:[%s15 + $0x8] sm:$0xff]
      %v701 = vld [vmem:[%s15 + $0x10] sm:$0xff]
      %v702 = vld [vmem:[%s15 + $0x18] sm:$0xff]
      %v703 = vld [vmem:[%s15 + $0x20] sm:$0xff]
      %v704 = vld [vmem:[%s15 + $0x28] sm:$0xff]
      %v705 = vld [vmem:[%s15 + $0x30] sm:$0xff]
      %v706 = vld [vmem:[%s15 + $0x38] sm:$0xff]
      %v707 = vld [vmem:[%s15 + $0x40] sm:$0xff]
      %v708 = vld [vmem:[%s15 + $0x48] sm:$0xff]
      %v709 = vld [vmem:[%s15 + $0x50] sm:$0xff]
      %v710 = vld [vmem:[%s15 + $0x58] sm:$0xff]
      %v711 = vld [vmem:[%s15 + $0x60] sm:$0xff]
      %v712 = vld [vmem:[%s15 + $0x68] sm:$0xff]
      %v713 = vld [vmem:[%s15 + $0x70] sm:$0xff]
      %v714 = vld [vmem:[%s15 + $0x78] sm:$0xff]
      %v715 = vld [vmem:[%s15 + $0x80] sm:$0xff]
      %v716 = vld [vmem:[%s15 + $0x88] sm:$0xff]
      %v717 = vld [vmem:[%s15 + $0x90] sm:$0xff]
      %v718 = vld [vmem:[%s15 + $0x98] sm:$0xff]
      %v719 = vld [vmem:[%s15 + $0xa0] sm:$0xff]
      %v720 = vld [vmem:[%s15 + $0xa8] sm:$0xff]
      %v721 = vld [vmem:[%s15 + $0xb0] sm:$0xff]
      %v722 = vld [vmem:[%s15 + $0xb8] sm:$0xff]
      %v723 = vld [vmem:[%s15 + $0xc0] sm:$0xff]
      %v724 = vld [vmem:[%s15 + $0xc8] sm:$0xff]
      %v725 = vld [vmem:[%s15 + $0xd0] sm:$0xff]
      %v726 = vld [vmem:[%s15 + $0xd8] sm:$0xff]
      %v727 = vld [vmem:[%s15 + $0xe0] sm:$0xff]
      %v728 = vld [vmem:[%s15 + $0xe8] sm:$0xff]
      %v729 = vld [vmem:[%s15 + $0xf0] sm:$0xff]
      %v730 = vld [vmem:[%s15 + $0xf8] sm:$0xff]
      %732 = vst [vmem:[#allocation1] ss:$2 sm:$0xff] %v697
      %v733 = vld.sshfl [vmem:[#allocation1] sm:$0xff pattern:$0x75316420]
      %v734 = vld.sshfl [vmem:[#allocation1 + $0x8] sm:$0xff pattern:$0x75316420]
      %737 = vmatpush.msra.mxu0 %v714
      %738 = vmatpush.msra.mxu0 %v713
      %739 = vmatpush.msra.mxu0 %v712
      %740 = vmatpush.msra.mxu0 %v711
      %741 = vmatpush.msra.mxu0 %v710
      %742 = vmatpush.msra.mxu0 %v709
      %743 = vmatpush.msra.mxu0 %v708
      %744 = vmatpush.msra.mxu0 %v707
      %745 = vmatpush.msra.mxu0 %v706
      %746 = vmatpush.msra.mxu0 %v705
      %747 = vmatpush.msra.mxu0 %v704
      %748 = vmatpush.msra.mxu0 %v703
      %749 = vmatpush.msra.mxu0 %v702
      %750 = vmatpush.msra.mxu0 %v701
      %751 = vmatpush.msra.mxu0 %v700
      %752 = vmatpush.msra.mxu0 %v699
      %753 = vmatmul.f32.gmra.mxu0 %v733
      %v754 = vpop.f32.mrf.mxu0
      %v755 = vadd.f32 0.0, %v754
      %756 = vdwg.mxu0
      %757 = vmatpush.msra.mxu0 %v730
      %758 = vmatpush.msra.mxu0 %v729
      %759 = vmatpush.msra.mxu0 %v728
      %760 = vmatpush.msra.mxu0 %v727
      %761 = vmatpush.msra.mxu0 %v726
      %762 = vmatpush.msra.mxu0 %v725
      %763 = vmatpush.msra.mxu0 %v724
      %764 = vmatpush.msra.mxu0 %v723
      %765 = vmatpush.msra.mxu0 %v722
      %766 = vmatpush.msra.mxu0 %v721
      %767 = vmatpush.msra.mxu0 %v720
      %768 = vmatpush.msra.mxu0 %v719
      %769 = vmatpush.msra.mxu0 %v718
      %770 = vmatpush.msra.mxu0 %v717
      %771 = vmatpush.msra.mxu0 %v716
      %772 = vmatpush.msra.mxu0 %v715
      %773 = vmatmul.f32.gmra.mxu0 %v734
      %v774 = vpop.f32.mrf.mxu0
      %v775 = vadd.f32 %v755, %v774
      %776 = vdwg.mxu0
      %v777 = vld [vmem:[%s2] sm:$0xff]
      %779 = vset.pattern.permute.xlu0 0
      %780 = vperm.xlu0 %779, %v777
      %v781 = vpop.permute.xlu0 %780
      %vm783 = vcmask 31744
      %v785 = vsel %vm783, %v698, 0
      %vm787 = vcmask 1043456
      %v789 = vsel %vm787, %v775, 0
      %791 = vmatpush.msra.mxu0 0.0
      %792 = vmatpush.msra.mxu0 0.0
      %793 = vmatpush.msra.mxu0 0.0
      %794 = vmatpush.msra.mxu0 0.0
      %795 = vmatpush.msra.mxu0 0.0
      %796 = vmatpush.msra.mxu0 0.0
      %797 = vmatpush.msra.mxu0 0.0
      %798 = vmatpush.msra.mxu0 0.0
      %799 = vmatpush.msra.mxu0 0.0
      %800 = vmatpush.msra.mxu0 0.0
      %801 = vmatpush.msra.mxu0 0.0
      %802 = vmatpush.msra.mxu0 0.0
      %803 = vmatpush.msra.mxu0 0.0
      %804 = vmatpush.msra.mxu0 0.0
      %805 = vmatpush.msra.mxu0 0.0
      %806 = vmatpush.msra.mxu0 %v789
      %807 = vmatmul.f32.gmra.mxu0 %v785
      %v808 = vpop.f32.mrf.mxu0
      %v809 = vadd.f32 %v781, %v808
      %810 = vdwg.mxu0
      %v811 = vmax.f32 %v809, 0.0
      %v812 = vld [vmem:[%s3] sm:$0xff]
      %v813 = vld [vmem:[%s3 + $0x8] sm:$0xff]
      %v814 = vld [vmem:[%s16] sm:$0xff]
      %v815 = vld [vmem:[%s16 + $0x8] sm:$0xff]
      %v816 = vld [vmem:[%s16 + $0x10] sm:$0xff]
      %v817 = vld [vmem:[%s16 + $0x18] sm:$0xff]
      %v818 = vld [vmem:[%s16 + $0x20] sm:$0xff]
      %v819 = vld [vmem:[%s16 + $0x28] sm:$0xff]
      %v820 = vld [vmem:[%s16 + $0x30] sm:$0xff]
      %v821 = vld [vmem:[%s16 + $0x38] sm:$0xff]
      %vm822 = vcmask 523264
      %v824 = vsel %vm822, %v811, 0
      %826 = vmatpush.msra.mxu0 0.0
      %827 = vmatpush.msra.mxu0 0.0
      %828 = vmatpush.msra.mxu0 0.0
      %829 = vmatpush.msra.mxu0 0.0
      %830 = vmatpush.msra.mxu0 0.0
      %831 = vmatpush.msra.mxu0 0.0
      %832 = vmatpush.msra.mxu0 0.0
      %833 = vmatpush.msra.mxu0 0.0
      %834 = vmatpush.msra.mxu0 %v821
      %835 = vmatpush.msra.mxu0 %v820
      %836 = vmatpush.msra.mxu0 %v819
      %837 = vmatpush.msra.mxu0 %v818
      %838 = vmatpush.msra.mxu0 %v817
      %839 = vmatpush.msra.mxu0 %v816
      %840 = vmatpush.msra.mxu0 %v815
      %841 = vmatpush.msra.mxu0 %v814
      %842 = vmatmul.f32.gmra.mxu0 %v824
      %v843 = vpop.f32.mrf.mxu0
      %v844 = vadd.f32 0.0, %v843
      %845 = vdwg.mxu0
      %v846 = vld [vmem:[%s4] sm:$0xff]
      %v847 = vld [vmem:[%s4 + $0x8] sm:$0xff]
      %849 = vset.pattern.permute.xlu0 0
      %850 = vperm.xlu0 %849, %v846
      %v851 = vpop.permute.xlu0 %850
      %854 = vset.pattern.permute.xlu0 0
      %855 = vperm.xlu0 %854, %v847
      %v856 = vpop.permute.xlu0 %855
      %vm858 = vcmask 64512
      %v860 = vsel %vm858, %v812, 0
      %v863 = vsel %vm858, %v813, 0
      %865 = vmatpush.msra.mxu0 0.0
      %866 = vmatpush.msra.mxu0 0.0
      %867 = vmatpush.msra.mxu0 0.0
      %868 = vmatpush.msra.mxu0 0.0
      %869 = vmatpush.msra.mxu0 0.0
      %870 = vmatpush.msra.mxu0 0.0
      %871 = vmatpush.msra.mxu0 0.0
      %872 = vmatpush.msra.mxu0 0.0
      %873 = vmatpush.msra.mxu0 0.0
      %874 = vmatpush.msra.mxu0 0.0
      %875 = vmatpush.msra.mxu0 0.0
      %876 = vmatpush.msra.mxu0 0.0
      %877 = vmatpush.msra.mxu0 0.0
      %878 = vmatpush.msra.mxu0 0.0
      %879 = vmatpush.msra.mxu0 0.0
      %880 = vmatpush.msra.mxu0 %v844
      %881 = vmatmul.f32.gmra.mxu0 %v860
      %v882 = vpop.f32.mrf.mxu0
      %v883 = vadd.f32 %v851, %v882
      %884 = vmatmul.f32.gmra.mxu0 %v863
      %v885 = vpop.f32.mrf.mxu0
      %v886 = vadd.f32 %v856, %v885
      %887 = vdwg.mxu0
      %v888 = vmax.f32 %v883, 0.0
      %v889 = vmax.f32 %v886, 0.0
      %v890 = vld [vmem:[%s5] sm:$0xff]
      %v891 = vld [vmem:[%s5 + $0x8] sm:$0xff]
      %v892 = vld [vmem:[%s5 + $0x10] sm:$0xff]
      %v893 = vld [vmem:[%s5 + $0x18] sm:$0xff]
      %v894 = vld [vmem:[%s17] sm:$0xff]
      %v895 = vld [vmem:[%s17 + $0x8] sm:$0xff]
      %vm896 = vcmask 130048
      %v898 = vsel %vm896, %v888, 0
      %v901 = vsel %vm896, %v889, 0
      %903 = vmatpush.msra.mxu0 0.0
      %904 = vmatpush.msra.mxu0 0.0
      %905 = vmatpush.msra.mxu0 0.0
      %906 = vmatpush.msra.mxu0 0.0
      %907 = vmatpush.msra.mxu0 0.0
      %908 = vmatpush.msra.mxu0 0.0
      %909 = vmatpush.msra.mxu0 0.0
      %910 = vmatpush.msra.mxu0 0.0
      %911 = vmatpush.msra.mxu0 0.0
      %912 = vmatpush.msra.mxu0 0.0
      %913 = vmatpush.msra.mxu0 0.0
      %914 = vmatpush.msra.mxu0 0.0
      %915 = vmatpush.msra.mxu0 0.0
      %916 = vmatpush.msra.mxu0 0.0
      %917 = vmatpush.msra.mxu0 %v895
      %918 = vmatpush.msra.mxu0 %v894
      %919 = vmatmul.f32.gmra.mxu0 %v898
      %v920 = vpop.f32.mrf.mxu0
      %v921 = vadd.f32 0.0, %v920
      %922 = vmatmul.f32.gmra.mxu0 %v901
      %v923 = vpop.f32.mrf.mxu0
      %v924 = vadd.f32 0.0, %v923
      %925 = vdwg.mxu0
      %v926 = vld [vmem:[%s6] sm:$0xff]
      %v927 = vld [vmem:[%s6 + $0x8] sm:$0xff]
      %v928 = vld [vmem:[%s6 + $0x10] sm:$0xff]
      %v929 = vld [vmem:[%s6 + $0x18] sm:$0xff]
      %931 = vset.pattern.permute.xlu0 0
      %932 = vperm.xlu0 %931, %v926
      %v933 = vpop.permute.xlu0 %932
      %936 = vset.pattern.permute.xlu0 0
      %937 = vperm.xlu0 %936, %v927
      %v938 = vpop.permute.xlu0 %937
      %941 = vset.pattern.permute.xlu0 0
      %942 = vperm.xlu0 %941, %v928
      %v943 = vpop.permute.xlu0 %942
      %946 = vset.pattern.permute.xlu0 0
      %947 = vperm.xlu0 %946, %v929
      %v948 = vpop.permute.xlu0 %947
      %v951 = vsel %vm896, %v890, 0
      %v954 = vsel %vm896, %v891, 0
      %v957 = vsel %vm896, %v892, 0
      %v960 = vsel %vm896, %v893, 0
      %962 = vmatpush.msra.mxu0 0.0
      %963 = vmatpush.msra.mxu0 0.0
      %964 = vmatpush.msra.mxu0 0.0
      %965 = vmatpush.msra.mxu0 0.0
      %966 = vmatpush.msra.mxu0 0.0
      %967 = vmatpush.msra.mxu0 0.0
      %968 = vmatpush.msra.mxu0 0.0
      %969 = vmatpush.msra.mxu0 0.0
      %970 = vmatpush.msra.mxu0 0.0
      %971 = vmatpush.msra.mxu0 0.0
      %972 = vmatpush.msra.mxu0 0.0
      %973 = vmatpush.msra.mxu0 0.0
      %974 = vmatpush.msra.mxu0 0.0
      %975 = vmatpush.msra.mxu0 0.0
      %976 = vmatpush.msra.mxu0 %v924
      %977 = vmatpush.msra.mxu0 %v921
      %978 = vmatmul.f32.gmra.mxu0 %v951
      %v979 = vpop.f32.mrf.mxu0
      %v980 = vadd.f32 %v933, %v979
      %981 = vmatmul.f32.gmra.mxu0 %v954
      %v982 = vpop.f32.mrf.mxu0
      %v983 = vadd.f32 %v938, %v982
      %984 = vmatmul.f32.gmra.mxu0 %v957
      %v985 = vpop.f32.mrf.mxu0
      %v986 = vadd.f32 %v943, %v985
      %987 = vmatmul.f32.gmra.mxu0 %v960
      %v988 = vpop.f32.mrf.mxu0
      %v989 = vadd.f32 %v948, %v988
      %990 = vdwg.mxu0
      %v991 = vmax.f32 %v980, 0.0
      %v992 = vmax.f32 %v983, 0.0
      %v993 = vmax.f32 %v986, 0.0
      %v994 = vmax.f32 %v989, 0.0
      %v995 = vld [vmem:[%s7] sm:$0xff]
      %v996 = vld [vmem:[%s7 + $0x8] sm:$0xff]
      %v997 = vld [vmem:[%s7 + $0x10] sm:$0xff]
      %v998 = vld [vmem:[%s7 + $0x18] sm:$0xff]
      %v999 = vld [vmem:[%s8] sm:$0xff]
      %v1000 = vld [vmem:[%s8 + $0x8] sm:$0xff]
      %v1001 = vld [vmem:[%s8 + $0x10] sm:$0xff]
      %v1002 = vld [vmem:[%s8 + $0x18] sm:$0xff]
      %1004 = vset.pattern.permute.xlu0 0
      %1005 = vperm.xlu0 %1004, %v999
      %v1006 = vpop.permute.xlu0 %1005
      %1009 = vset.pattern.permute.xlu0 0
      %1010 = vperm.xlu0 %1009, %v1000
      %v1011 = vpop.permute.xlu0 %1010
      %1014 = vset.pattern.permute.xlu0 0
      %1015 = vperm.xlu0 %1014, %v1001
      %v1016 = vpop.permute.xlu0 %1015
      %1019 = vset.pattern.permute.xlu0 0
      %1020 = vperm.xlu0 %1019, %v1002
      %v1021 = vpop.permute.xlu0 %1020
      %vm1023 = vcmask 261120
      %v1025 = vsel %vm1023, %v995, 0
      %v1028 = vsel %vm1023, %v996, 0
      %v1031 = vsel %vm1023, %v997, 0
      %v1034 = vsel %vm1023, %v998, 0
      %1036 = vmatpush.msra.mxu0 0.0
      %1037 = vmatpush.msra.mxu0 0.0
      %1038 = vmatpush.msra.mxu0 0.0
      %1039 = vmatpush.msra.mxu0 0.0
      %1040 = vmatpush.msra.mxu0 0.0
      %1041 = vmatpush.msra.mxu0 0.0
      %1042 = vmatpush.msra.mxu0 0.0
      %1043 = vmatpush.msra.mxu0 0.0
      %1044 = vmatpush.msra.mxu0 0.0
      %1045 = vmatpush.msra.mxu0 0.0
      %1046 = vmatpush.msra.mxu0 0.0
      %1047 = vmatpush.msra.mxu0 0.0
      %1048 = vmatpush.msra.mxu0 %v994
      %1049 = vmatpush.msra.mxu0 %v993
      %1050 = vmatpush.msra.mxu0 %v992
      %1051 = vmatpush.msra.mxu0 %v991
      %1052 = vmatmul.f32.gmra.mxu0 %v1025
      %v1053 = vpop.f32.mrf.mxu0
      %v1054 = vadd.f32 %v1006, %v1053
      %1055 = vmatmul.f32.gmra.mxu0 %v1028
      %v1056 = vpop.f32.mrf.mxu0
      %v1057 = vadd.f32 %v1011, %v1056
      %1058 = vmatmul.f32.gmra.mxu0 %v1031
      %v1059 = vpop.f32.mrf.mxu0
      %v1060 = vadd.f32 %v1016, %v1059
      %1061 = vmatmul.f32.gmra.mxu0 %v1034
      %v1062 = vpop.f32.mrf.mxu0
      %v1063 = vadd.f32 %v1021, %v1062
      %1064 = vdwg.mxu0
      %v1065 = vmax.f32 %v1054, 0.0
      %v1066 = vmax.f32 %v1057, 0.0
      %v1067 = vmax.f32 %v1060, 0.0
      %v1068 = vmax.f32 %v1063, 0.0
      %v1069 = vsel %vm783, %v1065, 0.0
      %1070 = vadd.xlane.f32.xlu0 %v1069
      %v1071 = vpop.xlane.xlu0 %1070
      %v1072 = vsel %vm783, %v1066, 0.0
      %1073 = vadd.xlane.f32.xlu0 %v1072
      %v1074 = vpop.xlane.xlu0 %1073
      %v1075 = vsel %vm783, %v1067, 0.0
      %1076 = vadd.xlane.f32.xlu0 %v1075
      %v1077 = vpop.xlane.xlu0 %1076
      %v1078 = vsel %vm783, %v1068, 0.0
      %1079 = vadd.xlane.f32.xlu0 %v1078
      %v1080 = vpop.xlane.xlu0 %1079
      %v1081 = vrcp.pop 4.0
      %v1082 = vmul.f32 4.0, %v1081
      %v1083 = vsub.f32 1.0, %v1082
      %v1084 = vmul.f32 %v1081, %v1083
      %v1085 = vadd.f32 %v1081, %v1084
      %vm1086 = vweird.f32 %v1081
      %v1087 = vsel %vm1086, %v1081, %v1085
      %v1088 = vmul.f32 %v1071, %v1087
      %v1089 = vmul.f32 %v1074, %v1087
      %v1090 = vmul.f32 %v1077, %v1087
      %v1091 = vmul.f32 %v1080, %v1087
      %v1092 = vmul.f32 %v1088, %v1088
      %v1093 = vmul.f32 %v1089, %v1089
      %v1094 = vmul.f32 %v1090, %v1090
      %v1095 = vmul.f32 %v1091, %v1091
      %v1096 = vadd.f32 %v1092, %v1093
      %v1097 = vadd.f32 %v1096, %v1094
      %v1098 = vadd.f32 %v1097, %v1095
      %v1099 = vrot.slane %v1098, 4
      %v1100 = vadd.f32 %v1098, %v1099
      %v1101 = vrot.slane %v1100, 2
      %v1102 = vadd.f32 %v1100, %v1101
      %v1103 = vrot.slane %v1102, 1
      %v1104 = vadd.f32 %v1102, %v1103
      %v1105 = vmax.f32 %v1104, 1e-24
      %v1106 = vrsqrt.pop %v1105
      %v1107 = vmul.f32 %v1106, %v1105
      %v1108 = vmul.f32 %v1107, %v1106
      %v1109 = vmul.f32 0.5, %v1108
      %v1110 = vsub.f32 1.5, %v1109
      %v1111 = vmul.f32 %v1106, %v1110
      %vm1112 = vweird.f32 %v1105
      %vm1113 = vweird.f32 %v1106
      %vm1114 = vmor %vm1112, %vm1113
      %v1115 = vsel %vm1114, %v1106, %v1111
      %v1116 = vmul.f32 %v1088, %v1115
      %v1117 = vmul.f32 %v1089, %v1115
      %v1118 = vmul.f32 %v1090, %v1115
      %v1119 = vmul.f32 %v1091, %v1115
      %vm1120 = vcmask 7168
      %1121 = vst.msk [vmem:[%s696] sm:$0xff] %vm1120, %v1116
      %1122 = vst.msk [vmem:[%s696 + $0x8] sm:$0xff] %vm1120, %v1117
      %1123 = vst.msk [vmem:[%s696 + $0x10] sm:$0xff] %vm1120, %v1118
      %1124 = vst.msk [vmem:[%s696 + $0x18] sm:$0xff] %vm1120, %v1119
      %v1125 = vld [vmem:[%s18] sm:$0xff]
      %v1126 = vld [vmem:[%s18 + $0x8] sm:$0xff]
      %1127 = vmatpush.msra.mxu0 0.0
      %1128 = vmatpush.msra.mxu0 0.0
      %1129 = vmatpush.msra.mxu0 0.0
      %1130 = vmatpush.msra.mxu0 0.0
      %1131 = vmatpush.msra.mxu0 0.0
      %1132 = vmatpush.msra.mxu0 0.0
      %1133 = vmatpush.msra.mxu0 0.0
      %1134 = vmatpush.msra.mxu0 0.0
      %1135 = vmatpush.msra.mxu0 0.0
      %1136 = vmatpush.msra.mxu0 0.0
      %1137 = vmatpush.msra.mxu0 0.0
      %1138 = vmatpush.msra.mxu0 0.0
      %1139 = vmatpush.msra.mxu0 0.0
      %1140 = vmatpush.msra.mxu0 0.0
      %1141 = vmatpush.msra.mxu0 %v1126
      %1142 = vmatpush.msra.mxu0 %v1125
      %1143 = vmatmul.f32.gmra.mxu0 %v898
      %v1144 = vpop.f32.mrf.mxu0
      %v1145 = vadd.f32 0.0, %v1144
      %1146 = vmatmul.f32.gmra.mxu0 %v901
      %v1147 = vpop.f32.mrf.mxu0
      %v1148 = vadd.f32 0.0, %v1147
      %1149 = vdwg.mxu0
      %v1150 = vld [vmem:[%s19] sm:$0xf]
      %v1152 = vsel %vm783, %v991, 0
      %v1155 = vsel %vm783, %v992, 0
      %v1158 = vsel %vm783, %v993, 0
      %v1161 = vsel %vm783, %v994, 0
      %v1164 = vsel %vm783, %v1065, 0
      %v1167 = vsel %vm783, %v1066, 0
      %v1170 = vsel %vm783, %v1067, 0
      %v1173 = vsel %vm783, %v1068, 0
      %v1176 = vsel %vm787, %v1150, 0
      %1178 = vmatpush.msra.mxu0 0.0
      %1179 = vmatpush.msra.mxu0 0.0
      %1180 = vmatpush.msra.mxu0 0.0
      %1181 = vmatpush.msra.mxu0 0.0
      %1182 = vmatpush.msra.mxu0 0.0
      %1183 = vmatpush.msra.mxu0 0.0
      %1184 = vmatpush.msra.mxu0 0.0
      %1185 = vmatpush.msra.mxu0 0.0
      %1186 = vmatpush.msra.mxu0 0.0
      %1187 = vmatpush.msra.mxu0 0.0
      %1188 = vmatpush.msra.mxu0 0.0
      %1189 = vmatpush.msra.mxu0 0.0
      %1190 = vmatpush.msra.mxu0 0.0
      %1191 = vmatpush.msra.mxu0 0.0
      %1192 = vmatpush.msra.mxu0 0.0
      %1193 = vmatpush.msra.mxu0 %v1176
      %1194 = vmatmul.f32.gmra.mxu0 %v1152
      %v1195 = vpop.f32.mrf.mxu0
      %v1196 = vadd.f32 0.0, %v1195
      %1197 = vmatmul.f32.gmra.mxu0 %v1155
      %v1198 = vpop.f32.mrf.mxu0
      %v1199 = vadd.f32 0.0, %v1198
      %1200 = vmatmul.f32.gmra.mxu0 %v1158
      %v1201 = vpop.f32.mrf.mxu0
      %v1202 = vadd.f32 0.0, %v1201
      %1203 = vmatmul.f32.gmra.mxu0 %v1161
      %v1204 = vpop.f32.mrf.mxu0
      %v1205 = vadd.f32 0.0, %v1204
      %1206 = vmatmul.f32.gmra.mxu0 %v1164
      %v1207 = vpop.f32.mrf.mxu0
      %v1208 = vadd.f32 0.0, %v1207
      %1209 = vmatmul.f32.gmra.mxu0 %v1167
      %v1210 = vpop.f32.mrf.mxu0
      %v1211 = vadd.f32 0.0, %v1210
      %1212 = vmatmul.f32.gmra.mxu0 %v1170
      %v1213 = vpop.f32.mrf.mxu0
      %v1214 = vadd.f32 0.0, %v1213
      %1215 = vmatmul.f32.gmra.mxu0 %v1173
      %v1216 = vpop.f32.mrf.mxu0
      %v1217 = vadd.f32 0.0, %v1216
      %1218 = vdwg.mxu0
      %v1219 = vld [vmem:[%s9] sm:$0xff]
      %v1220 = vld [vmem:[%s9 + $0x8] sm:$0xff]
      %v1221 = vld [vmem:[%s9 + $0x10] sm:$0xff]
      %v1222 = vld [vmem:[%s9 + $0x18] sm:$0xff]
      %v1223 = vld [vmem:[%s10] sm:$0xff]
      %v1224 = vld [vmem:[%s10 + $0x8] sm:$0xff]
      %v1225 = vld [vmem:[%s10 + $0x10] sm:$0xff]
      %v1226 = vld [vmem:[%s10 + $0x18] sm:$0xff]
      %v1228 = vsel %vm896, %v1223, 0
      %v1231 = vsel %vm896, %v1224, 0
      %v1234 = vsel %vm896, %v1225, 0
      %v1237 = vsel %vm896, %v1226, 0
      %1239 = vmatpush.msra.mxu0 0.0
      %1240 = vmatpush.msra.mxu0 0.0
      %1241 = vmatpush.msra.mxu0 0.0
      %1242 = vmatpush.msra.mxu0 0.0
      %1243 = vmatpush.msra.mxu0 0.0
      %1244 = vmatpush.msra.mxu0 0.0
      %1245 = vmatpush.msra.mxu0 0.0
      %1246 = vmatpush.msra.mxu0 0.0
      %1247 = vmatpush.msra.mxu0 0.0
      %1248 = vmatpush.msra.mxu0 0.0
      %1249 = vmatpush.msra.mxu0 0.0
      %1250 = vmatpush.msra.mxu0 0.0
      %1251 = vmatpush.msra.mxu0 0.0
      %1252 = vmatpush.msra.mxu0 0.0
      %1253 = vmatpush.msra.mxu0 %v1148
      %1254 = vmatpush.msra.mxu0 %v1145
      %1255 = vmatmul.f32.gmra.mxu0 %v1228
      %v1256 = vpop.f32.mrf.mxu0
      %v1257 = vadd.f32 0.0, %v1256
      %1258 = vmatmul.f32.gmra.mxu0 %v1231
      %v1259 = vpop.f32.mrf.mxu0
      %v1260 = vadd.f32 0.0, %v1259
      %1261 = vmatmul.f32.gmra.mxu0 %v1234
      %v1262 = vpop.f32.mrf.mxu0
      %v1263 = vadd.f32 0.0, %v1262
      %1264 = vmatmul.f32.gmra.mxu0 %v1237
      %v1265 = vpop.f32.mrf.mxu0
      %v1266 = vadd.f32 0.0, %v1265
      %1267 = vdwg.mxu0
      %v1269 = vsel %vm858, %v1219, 0
      %v1272 = vsel %vm858, %v1220, 0
      %v1275 = vsel %vm858, %v1221, 0
      %v1278 = vsel %vm858, %v1222, 0
      %1280 = vmatpush.msra.mxu0 0.0
      %1281 = vmatpush.msra.mxu0 0.0
      %1282 = vmatpush.msra.mxu0 0.0
      %1283 = vmatpush.msra.mxu0 0.0
      %1284 = vmatpush.msra.mxu0 0.0
      %1285 = vmatpush.msra.mxu0 0.0
      %1286 = vmatpush.msra.mxu0 0.0
      %1287 = vmatpush.msra.mxu0 0.0
      %1288 = vmatpush.msra.mxu0 0.0
      %1289 = vmatpush.msra.mxu0 0.0
      %1290 = vmatpush.msra.mxu0 0.0
      %1291 = vmatpush.msra.mxu0 0.0
      %1292 = vmatpush.msra.mxu0 0.0
      %1293 = vmatpush.msra.mxu0 0.0
      %1294 = vmatpush.msra.mxu0 0.0
      %1295 = vmatpush.msra.mxu0 %v811
      %1296 = vmatmul.f32.gmra.mxu0 %v1269
      %v1297 = vpop.f32.mrf.mxu0
      %v1298 = vadd.f32 %v1257, %v1297
      %1299 = vmatmul.f32.gmra.mxu0 %v1272
      %v1300 = vpop.f32.mrf.mxu0
      %v1301 = vadd.f32 %v1260, %v1300
      %1302 = vmatmul.f32.gmra.mxu0 %v1275
      %v1303 = vpop.f32.mrf.mxu0
      %v1304 = vadd.f32 %v1263, %v1303
      %1305 = vmatmul.f32.gmra.mxu0 %v1278
      %v1306 = vpop.f32.mrf.mxu0
      %v1307 = vadd.f32 %v1266, %v1306
      %1308 = vdwg.mxu0
      %v1309 = vld [vmem:[%s11] sm:$0xff]
      %v1310 = vld [vmem:[%s11 + $0x8] sm:$0xff]
      %v1311 = vld [vmem:[%s11 + $0x10] sm:$0xff]
      %v1312 = vld [vmem:[%s11 + $0x18] sm:$0xff]
      %v1314 = vsel %vm822, %v1309, 0
      %v1317 = vsel %vm822, %v1310, 0
      %v1320 = vsel %vm822, %v1311, 0
      %v1323 = vsel %vm822, %v1312, 0
      %1325 = vmatpush.msra.mxu0 0.0
      %1326 = vmatpush.msra.mxu0 0.0
      %1327 = vmatpush.msra.mxu0 0.0
      %1328 = vmatpush.msra.mxu0 0.0
      %1329 = vmatpush.msra.mxu0 0.0
      %1330 = vmatpush.msra.mxu0 0.0
      %1331 = vmatpush.msra.mxu0 0.0
      %1332 = vmatpush.msra.mxu0 0.0
      %1333 = vmatpush.msra.mxu0 %v1217
      %1334 = vmatpush.msra.mxu0 %v1214
      %1335 = vmatpush.msra.mxu0 %v1211
      %1336 = vmatpush.msra.mxu0 %v1208
      %1337 = vmatpush.msra.mxu0 %v1205
      %1338 = vmatpush.msra.mxu0 %v1202
      %1339 = vmatpush.msra.mxu0 %v1199
      %1340 = vmatpush.msra.mxu0 %v1196
      %1341 = vmatmul.f32.gmra.mxu0 %v1314
      %v1342 = vpop.f32.mrf.mxu0
      %v1343 = vadd.f32 0.0, %v1342
      %1344 = vmatmul.f32.gmra.mxu0 %v1317
      %v1345 = vpop.f32.mrf.mxu0
      %v1346 = vadd.f32 0.0, %v1345
      %1347 = vmatmul.f32.gmra.mxu0 %v1320
      %v1348 = vpop.f32.mrf.mxu0
      %v1349 = vadd.f32 0.0, %v1348
      %1350 = vmatmul.f32.gmra.mxu0 %v1323
      %v1351 = vpop.f32.mrf.mxu0
      %v1352 = vadd.f32 0.0, %v1351
      %1353 = vdwg.mxu0
      %v1354 = vadd.f32 %v1298, %v1343
      %v1355 = vadd.f32 %v1301, %v1346
      %v1356 = vadd.f32 %v1304, %v1349
      %v1357 = vadd.f32 %v1307, %v1352
      %v1358 = vld [vmem:[%s12] sm:$0xff]
      %v1359 = vld [vmem:[%s12 + $0x8] sm:$0xff]
      %v1360 = vld [vmem:[%s12 + $0x10] sm:$0xff]
      %v1361 = vld [vmem:[%s12 + $0x18] sm:$0xff]
      %1363 = vset.pattern.permute.xlu0 0
      %1364 = vperm.xlu0 %1363, %v1358
      %v1365 = vpop.permute.xlu0 %1364
      %1368 = vset.pattern.permute.xlu0 0
      %1369 = vperm.xlu0 %1368, %v1359
      %v1370 = vpop.permute.xlu0 %1369
      %1373 = vset.pattern.permute.xlu0 0
      %1374 = vperm.xlu0 %1373, %v1360
      %v1375 = vpop.permute.xlu0 %1374
      %1378 = vset.pattern.permute.xlu0 0
      %1379 = vperm.xlu0 %1378, %v1361
      %v1380 = vpop.permute.xlu0 %1379
      %v1382 = vadd.f32 %v1354, %v1365
      %v1383 = vadd.f32 %v1355, %v1370
      %v1384 = vadd.f32 %v1356, %v1375
      %v1385 = vadd.f32 %v1357, %v1380
      %v1386 = vmax.f32 %v1382, 0.0
      %v1387 = vmax.f32 %v1383, 0.0
      %v1388 = vmax.f32 %v1384, 0.0
      %v1389 = vmax.f32 %v1385, 0.0
      %v1390 = vld [vmem:[%s13] sm:$0x7]
      %v1391 = vld [vmem:[%s14] sm:$0x7]
      %1393 = vset.pattern.permute.xlu0 0
      %1394 = vperm.xlu0 %1393, %v1391
      %v1395 = vpop.permute.xlu0 %1394
      %v1398 = vsel %vm1023, %v1390, 0
      %1400 = vmatpush.msra.mxu0 0.0
      %1401 = vmatpush.msra.mxu0 0.0
      %1402 = vmatpush.msra.mxu0 0.0
      %1403 = vmatpush.msra.mxu0 0.0
      %1404 = vmatpush.msra.mxu0 0.0
      %1405 = vmatpush.msra.mxu0 0.0
      %1406 = vmatpush.msra.mxu0 0.0
      %1407 = vmatpush.msra.mxu0 0.0
      %1408 = vmatpush.msra.mxu0 0.0
      %1409 = vmatpush.msra.mxu0 0.0
      %1410 = vmatpush.msra.mxu0 0.0
      %1411 = vmatpush.msra.mxu0 0.0
      %1412 = vmatpush.msra.mxu0 %v1389
      %1413 = vmatpush.msra.mxu0 %v1388
      %1414 = vmatpush.msra.mxu0 %v1387
      %1415 = vmatpush.msra.mxu0 %v1386
      %1416 = vmatmul.f32.gmra.mxu0 %v1398
      %v1417 = vpop.f32.mrf.mxu0
      %v1418 = vadd.f32 %v1395, %v1417
      %1419 = vdwg.mxu0
      %v1420 = vld [vmem:[%s20] sm:$0xff]
      %v1421 = vld [vmem:[%s20 + $0x8] sm:$0xff]
      %v1422 = vld [vmem:[%s20 + $0x10] sm:$0xff]
      %v1423 = vld [vmem:[%s20 + $0x18] sm:$0xff]
      %v1424 = vld [vmem:[%s20 + $0x20] sm:$0xff]
      %v1425 = vld [vmem:[%s20 + $0x28] sm:$0xff]
      %v1426 = vld [vmem:[%s20 + $0x30] sm:$0xff]
      %v1427 = vld [vmem:[%s20 + $0x38] sm:$0xff]
      %v1428 = vld [vmem:[%s20 + $0x40] sm:$0xff]
      %v1429 = vld [vmem:[%s20 + $0x48] sm:$0xff]
      %v1430 = vld [vmem:[%s20 + $0x50] sm:$0xff]
      %v1431 = vld [vmem:[%s20 + $0x58] sm:$0xff]
      %v1432 = vld [vmem:[%s20 + $0x60] sm:$0xff]
      %v1433 = vld [vmem:[%s20 + $0x68] sm:$0xff]
      %v1434 = vld [vmem:[%s20 + $0x70] sm:$0xff]
      %v1435 = vld [vmem:[%s20 + $0x78] sm:$0xff]
      %v1437 = vsel %vm822, %v1418, 0
      %1439 = vmatpush.msra.mxu0 0.0
      %1440 = vmatpush.msra.mxu0 0.0
      %1441 = vmatpush.msra.mxu0 0.0
      %1442 = vmatpush.msra.mxu0 0.0
      %1443 = vmatpush.msra.mxu0 0.0
      %1444 = vmatpush.msra.mxu0 0.0
      %1445 = vmatpush.msra.mxu0 0.0
      %1446 = vmatpush.msra.mxu0 0.0
      %1447 = vmatpush.msra.mxu0 %v1434
      %1448 = vmatpush.msra.mxu0 %v1432
      %1449 = vmatpush.msra.mxu0 %v1430
      %1450 = vmatpush.msra.mxu0 %v1428
      %1451 = vmatpush.msra.mxu0 %v1426
      %1452 = vmatpush.msra.mxu0 %v1424
      %1453 = vmatpush.msra.mxu0 %v1422
      %1454 = vmatpush.msra.mxu0 %v1420
      %1455 = vmatmul.f32.gmra.mxu0 %v1437
      %v1456 = vpop.f32.mrf.mxu0
      %v1457 = vadd.f32 0.0, %v1456
      %1458 = vdwg.mxu0
      %1459 = vmatpush.msra.mxu0 0.0
      %1460 = vmatpush.msra.mxu0 0.0
      %1461 = vmatpush.msra.mxu0 0.0
      %1462 = vmatpush.msra.mxu0 0.0
      %1463 = vmatpush.msra.mxu0 0.0
      %1464 = vmatpush.msra.mxu0 0.0
      %1465 = vmatpush.msra.mxu0 0.0
      %1466 = vmatpush.msra.mxu0 0.0
      %1467 = vmatpush.msra.mxu0 %v1435
      %1468 = vmatpush.msra.mxu0 %v1433
      %1469 = vmatpush.msra.mxu0 %v1431
      %1470 = vmatpush.msra.mxu0 %v1429
      %1471 = vmatpush.msra.mxu0 %v1427
      %1472 = vmatpush.msra.mxu0 %v1425
      %1473 = vmatpush.msra.mxu0 %v1423
      %1474 = vmatpush.msra.mxu0 %v1421
      %1475 = vmatmul.f32.gmra.mxu0 %v1437
      %v1476 = vpop.f32.mrf.mxu0
      %v1477 = vadd.f32 0.0, %v1476
      %1478 = vdwg.mxu0
      %v1481 = vrot.slane %v1477, 4
      %v1482 = vsel %vm787, %v1457, %v1481
      %1484 = vst [vmem:[%s691] sm:$0x77] %v1482
      %p1485 = scmp.lt.s32.totalorder %s34, 1
      %s1486 = scalar_select %p1485, %s34, 1
      %s1487 = smul.addr %s1486, 2
      %s1488 = smul.addr %s1487, 4
      %s1489 = scalar_lea.vmem %s21, %s1488
      %p1490 = scmp.lt.s32.totalorder %s34, 1
      %s1491 = scalar_select %p1490, %s34, 1
      %s1492 = smul.addr %s1491, 4
      %s1493 = smul.addr %s1492, 8
      %s1494 = scalar_lea.vmem %s22, %s1493
      // Predicated region
      $region105: #{_fused_forward.1} parent=103 // pred_check
        %p1495 = pneg %p498
      $region106: #{_fused_forward.1} parent=103 // pred_check_branch
        %1497 = sbr.rel (%p1495) target = $region108
      $region107: #{_fused_forward.1} parent=103 // pred_region
        _
      $region108: #{_fused_forward.1} parent=103 // pred_fallthru
        _
      // Predicated region
      $region109: #{_fused_forward.1} parent=103 // pred_check
        %p1498 = pneg %p524
      $region110: #{_fused_forward.1} parent=103 // pred_check_branch
        %1500 = sbr.rel (%p1498) target = $region112
      $region111: #{_fused_forward.1} parent=103 // pred_region
        _
      $region112: #{_fused_forward.1} parent=103 // pred_fallthru
        _
    $region104: #{_fused_forward.1} parent=5 // pred_fallthru
      _
    %p1501 = scmp.le.s32.totalorder 2, %s29
    // Predicated region
    $region113: #{_fused_forward.1} parent=5 // pred_check
      %p1502 = pneg %p1501
    $region114: #{_fused_forward.1} parent=5 // pred_check_branch
      %1504 = sbr.rel (%p1502) target = $region116
    $region115: #{_fused_forward.1} parent=5 // pred_region
      %s1505 = ssub.s32 %s29, 2
      // Predicated region
      $region117: #{_fused_forward.1} parent=115 // pred_check
        %p1506 = pneg %p504
      $region118: #{_fused_forward.1} parent=115 // pred_check_branch
        %1508 = sbr.rel (%p1506) target = $region120
      $region119: #{_fused_forward.1} parent=115 // pred_region
        %p1509 = scmp.lt.s32.totalorder %s35, 1
        %s1510 = scalar_select %p1509, %s35, 1
        %s1511 = smul.addr %s1510, 2
        %s1512 = smul.addr %s1511, 4
        %s1513 = scalar_lea.vmem %s21, %s1512
      $region120: #{_fused_forward.1} parent=115 // pred_fallthru
        _
      // Predicated region
      $region121: #{_fused_forward.1} parent=115 // pred_check
        %p1514 = pneg %p530
      $region122: #{_fused_forward.1} parent=115 // pred_check_branch
        %1516 = sbr.rel (%p1514) target = $region124
      $region123: #{_fused_forward.1} parent=115 // pred_region
        %p1517 = scmp.lt.s32.totalorder %s35, 1
        %s1518 = scalar_select %p1517, %s35, 1
        %s1519 = smul.addr %s1518, 4
        %s1520 = smul.addr %s1519, 8
        %s1521 = scalar_lea.vmem %s22, %s1520
      $region124: #{_fused_forward.1} parent=115 // pred_fallthru
        _
    $region116: #{_fused_forward.1} parent=5 // pred_fallthru
      _
  $region6: #{_fused_forward.1} parent=0 // loop_footer
    %s33 = sadd.s32 1, %s29
  $region7: #{_fused_forward.1} parent=0 // loop_footer_branch
    %28 = sbr.rel target = $region3
  $region8: #{_fused_forward.1} parent=0 // loop_exit
    _

</llo_original>
